<compile_context>
chip_gen: v5e
topology: v5e:2x2
jax: 0.10.0
libtpu: 0.0.40
codegen_flags: <defaults>
</compile_context>

<pallas_src>
import jax
import jax.numpy as jnp
from jax.experimental import pallas as pl
from jax.experimental.pallas import tpu as pltpu


def _make_rnn_kernel(n_layers, seq_len, batch_pad, hidden_dim, has_seq_scratch):
    L, T, B, H = n_layers, seq_len, batch_pad, hidden_dim

    def kernel(*refs):
        # inputs
        x_ref, h0_ref, c0_ref = refs[0], refs[1], refs[2]
        layer_refs = refs[3:3 + 3 * L]                    # (w_ih_t, w_hh_t, b) per layer
        fc_w_ref, fc_b_ref = refs[3 + 3 * L], refs[4 + 3 * L]
        # outputs
        hn_ref, cn_ref, logits_ref = refs[5 + 3 * L], refs[6 + 3 * L], refs[7 + 3 * L]
        # scratch: sequence buffer feeding the next layer (only if L > 1)
        seq_ref = refs[8 + 3 * L] if has_seq_scratch else None

        h = None
        for l in range(L):
            w_ih_t = layer_refs[3 * l][...]               # (in_dim, 4H)  pre-transposed
            w_hh_t = layer_refs[3 * l + 1][...]           # (H, 4H)       pre-transposed
            b = layer_refs[3 * l + 2][...]                # (1, 4H) == b_ih + b_hh

            # Full previous-layer sequence (value load happens before any
            # stores back into seq_ref, so reuse of the buffer is safe).
            seq_in = x_ref[...] if l == 0 else seq_ref[...]     # (T*B, in_dim)

            # --- Hoisted x-side gate pre-activations for ALL timesteps ---
            # One big MXU call instead of T tiny ones; bias folded in so the
            # recurrence body has no bias add / broadcast.
            xw = jnp.dot(seq_in, w_ih_t,
                         preferred_element_type=jnp.float32) + b   # (T*B, 4H)

            h = h0_ref[l]                                  # (B, H)
            c = c0_ref[l]                                  # (B, H)
            write_seq = l < L - 1

            # Fully unrolled recurrence: only h @ W_hh^T + gate math on the
            # serial path; all indices static.
            for t in range(T):
                gates = xw[t * B:(t + 1) * B, :] + jnp.dot(
                    h, w_hh_t, preferred_element_type=jnp.float32)   # (B, 4H)
                sig = jax.nn.sigmoid(gates)                # full-width (B, 128) on EUP
                tnh = jnp.tanh(gates)
                i = sig[:, 0 * H:1 * H]
                f = sig[:, 1 * H:2 * H]
                g = tnh[:, 2 * H:3 * H]
                o = sig[:, 3 * H:4 * H]
                c = f * c + i * g
                h = o * jnp.tanh(c)
                if write_seq:
                    seq_ref[t * B:(t + 1) * B, :] = h      # static store

            hn_ref[l] = h
            cn_ref[l] = c

        # fc applied to the last time step of the top layer:
        # out = fc(lstm_out[:, -1, :]) == fc(h_n[-1])
        logits_ref[...] = (jnp.dot(h, fc_w_ref[...],
                                   preferred_element_type=jnp.float32)
                           + fc_b_ref[...])

    return kernel


def rnn_forward(params, input_ids, hidden, *, n_layers, hidden_dim, output_size):
    H, L, O = hidden_dim, n_layers, output_size

    # Embedding lookup (gather) in plain JAX glue.
    embeds = jnp.take(params["embedding"], input_ids.astype(jnp.int32), axis=0)
    embeds = embeds.astype(jnp.float32)                   # (B, T, E)
    B, T, E = embeds.shape
    h0, c0 = hidden

    # Pad batch to one full sublane group (multiple of 8).
    B_pad = max(8, ((B + 7) // 8) * 8)
    pad_b = B_pad - B

    x_tm = jnp.transpose(embeds, (1, 0, 2))               # (T, B, E) time-major
    if pad_b:
        x_tm = jnp.pad(x_tm, ((0, 0), (0, pad_b), (0, 0)))
        h0 = jnp.pad(h0, ((0, 0), (0, pad_b), (0, 0)))
        c0 = jnp.pad(c0, ((0, 0), (0, pad_b), (0, 0)))
    x_flat = x_tm.reshape(T * B_pad, E)                   # row t*B_pad + b

    # Lane-dense FC output: pad O up to a full 128-lane width.
    O_pad = ((O + 127) // 128) * 128
    fc_w_t = jnp.zeros((H, O_pad), jnp.float32).at[:, :O].set(params["fc_w"].T)
    fc_b = jnp.zeros((1, O_pad), jnp.float32).at[0, :O].set(params["fc_b"])

    # Pre-transposed weights + pre-summed biases (no in-kernel transposes).
    layer_args = []
    for l in range(L):
        layer_args += [
            params[f"w_ih{l}"].T,                         # (in_dim, 4H)
            params[f"w_hh{l}"].T,                         # (H, 4H)
            (params[f"b_ih{l}"] + params[f"b_hh{l}"]).reshape(1, 4 * H),
        ]

    args = [x_flat, h0, c0] + layer_args + [fc_w_t, fc_b]

    out_shapes = (
        jax.ShapeDtypeStruct((L, B_pad, H), jnp.float32),   # h_n
        jax.ShapeDtypeStruct((L, B_pad, H), jnp.float32),   # c_n
        jax.ShapeDtypeStruct((B_pad, O_pad), jnp.float32),  # last-step logits
    )

    vmem = pl.BlockSpec(memory_space=pltpu.MemorySpace.VMEM)
    scratch_shapes = (
        [pltpu.VMEM((T * B_pad, H), jnp.float32)] if L > 1 else [])

    h_n, c_n, logits = pl.pallas_call(
        _make_rnn_kernel(L, T, B_pad, H, L > 1),
        out_shape=out_shapes,
        in_specs=[vmem] * len(args),
        out_specs=(vmem, vmem, vmem),
        scratch_shapes=scratch_shapes,
    )(*args)

    # Slice padding back off.
    logits = logits[:B, :O]
    h_n = h_n[:, :B, :]
    c_n = c_n[:, :B, :]

    # nn.Dropout with p=0.0 / eval mode is identity.
    # TODO(synk): stochastic dropout (training mode, p>0) not implemented.
    return logits, (h_n, c_n)


def init_params(key, vocab_size, output_size, embedding_dim, hidden_dim, n_layers):
    """Deterministic init mirroring PyTorch default shapes/init scales."""
    params = {}
    ks = jax.random.split(key, 2 + 4 * n_layers + 2)
    k = 0
    params["embedding"] = jax.random.normal(
        ks[k], (vocab_size, embedding_dim), jnp.float32); k += 1
    bound = 1.0 / jnp.sqrt(hidden_dim)
    for l in range(n_layers):
        in_dim = embedding_dim if l == 0 else hidden_dim
        params[f"w_ih{l}"] = jax.random.uniform(
            ks[k], (4 * hidden_dim, in_dim), jnp.float32, -bound, bound); k += 1
        params[f"w_hh{l}"] = jax.random.uniform(
            ks[k], (4 * hidden_dim, hidden_dim), jnp.float32, -bound, bound); k += 1
        params[f"b_ih{l}"] = jax.random.uniform(
            ks[k], (4 * hidden_dim,), jnp.float32, -bound, bound); k += 1
        params[f"b_hh{l}"] = jax.random.uniform(
            ks[k], (4 * hidden_dim,), jnp.float32, -bound, bound); k += 1
    fc_bound = 1.0 / jnp.sqrt(hidden_dim)
    params["fc_w"] = jax.random.uniform(
        ks[k], (output_size, hidden_dim), jnp.float32, -fc_bound, fc_bound); k += 1
    params["fc_b"] = jax.random.uniform(
        ks[k], (output_size,), jnp.float32, -fc_bound, fc_bound); k += 1
    return params


def reference_forward(params, input_ids, hidden, *, n_layers, hidden_dim,
                      output_size):
    """Pure-JAX reference replicating PyTorch LSTM/forward semantics."""
    H = hidden_dim
    x = jnp.take(params["embedding"], input_ids.astype(jnp.int32), axis=0)
    x = x.astype(jnp.float32)                             # (B, T, E)
    h0, c0 = hidden
    hs, cs = [], []
    layer_in = x
    B, T, _ = x.shape
    for l in range(n_layers):
        w_ih, w_hh = params[f"w_ih{l}"], params[f"w_hh{l}"]
        b = params[f"b_ih{l}"] + params[f"b_hh{l}"]
        h, c = h0[l], c0[l]
        outs = []
        for t in range(T):
            gates = layer_in[:, t, :] @ w_ih.T + h @ w_hh.T + b
            i = jax.nn.sigmoid(gates[:, :H])
            f = jax.nn.sigmoid(gates[:, H:2 * H])
            g = jnp.tanh(gates[:, 2 * H:3 * H])
            o = jax.nn.sigmoid(gates[:, 3 * H:])
            c = f * c + i * g
            h = o * jnp.tanh(c)
            outs.append(h)
        layer_in = jnp.stack(outs, axis=1)
        hs.append(h)
        cs.append(c)
    out = layer_in[:, -1, :] @ params["fc_w"].T + params["fc_b"]
    return out, (jnp.stack(hs), jnp.stack(cs))


if __name__ == "__main__":
    # Small config consistent with the module's constructor.
    vocab_size, output_size = 50, 2
    embedding_dim, hidden_dim = 16, 32
    n_layers, bidirectional, dropout = 2, False, 0.0
    batch, seq = 2, 8

    key = jax.random.PRNGKey(0)
    k_param, k_ids = jax.random.split(key)
    params = init_params(k_param, vocab_size, output_size, embedding_dim,
                         hidden_dim, n_layers)

    input_ids = jax.random.randint(k_ids, (batch, seq), 0, vocab_size,
                                   dtype=jnp.int32)
    # init_hidden(): zeros of shape (n_layers * num_directions, B, H)
    h0 = jnp.zeros((n_layers, batch, hidden_dim), jnp.float32)
    c0 = jnp.zeros((n_layers, batch, hidden_dim), jnp.float32)

    out, (h_n, c_n) = rnn_forward(
        params, input_ids, (h0, c0),
        n_layers=n_layers, hidden_dim=hidden_dim, output_size=output_size)
    out = jax.block_until_ready(out)
    h_n = jax.block_until_ready(h_n)
    c_n = jax.block_until_ready(c_n)

    ref_out, (ref_h, ref_c) = reference_forward(
        params, input_ids, (h0, c0),
        n_layers=n_layers, hidden_dim=hidden_dim, output_size=output_size)

    assert out.shape == (batch, output_size)
    assert h_n.shape == (n_layers, batch, hidden_dim)
    assert c_n.shape == (n_layers, batch, hidden_dim)
    assert jnp.allclose(out, ref_out, atol=1e-4, rtol=1e-4)
    assert jnp.allclose(h_n, ref_h, atol=1e-4, rtol=1e-4)
    assert jnp.allclose(c_n, ref_c, atol=1e-4, rtol=1e-4)

    print("KERNEL_OK")
</pallas_src>

<mosaic_0001>
module attributes {stable_mosaic.version = 11 : i64} {
  func.func @kernel(%arg0: memref<64x16xf32, #tpu.memory_space<vmem>>, %arg1: memref<2x8x32xf32, #tpu.memory_space<vmem>>, %arg2: memref<2x8x32xf32, #tpu.memory_space<vmem>>, %arg3: memref<16x128xf32, #tpu.memory_space<vmem>>, %arg4: memref<32x128xf32, #tpu.memory_space<vmem>>, %arg5: memref<1x128xf32, #tpu.memory_space<vmem>>, %arg6: memref<32x128xf32, #tpu.memory_space<vmem>>, %arg7: memref<32x128xf32, #tpu.memory_space<vmem>>, %arg8: memref<1x128xf32, #tpu.memory_space<vmem>>, %arg9: memref<32x128xf32, #tpu.memory_space<vmem>>, %arg10: memref<1x128xf32, #tpu.memory_space<vmem>>, %arg11: memref<2x8x32xf32, #tpu.memory_space<vmem>>, %arg12: memref<2x8x32xf32, #tpu.memory_space<vmem>>, %arg13: memref<8x128xf32, #tpu.memory_space<vmem>>, %arg14: memref<64x32xf32, #tpu.memory_space<vmem>>) attributes {dimension_semantics = [], scalar_prefetch = 0 : i64, scratch_operands = 1 : i64, tpu.core_type = #tpu.core_type<tc>} {
    %c0 = arith.constant 0 : index
    %c0_0 = arith.constant 0 : index
    %0 = vector.load %arg3[%c0, %c0_0] : memref<16x128xf32, #tpu.memory_space<vmem>>, vector<16x128xf32>
    %c0_1 = arith.constant 0 : index
    %c0_2 = arith.constant 0 : index
    %1 = vector.load %arg4[%c0_1, %c0_2] : memref<32x128xf32, #tpu.memory_space<vmem>>, vector<32x128xf32>
    %c0_3 = arith.constant 0 : index
    %c0_4 = arith.constant 0 : index
    %2 = vector.load %arg5[%c0_3, %c0_4] : memref<1x128xf32, #tpu.memory_space<vmem>>, vector<1x128xf32>
    %c0_5 = arith.constant 0 : index
    %c0_6 = arith.constant 0 : index
    %3 = vector.load %arg0[%c0_5, %c0_6] : memref<64x16xf32, #tpu.memory_space<vmem>>, vector<64x16xf32>
    %cst = arith.constant dense<0.000000e+00> : vector<64x128xf32>
    %4 = tpu.matmul %3, %0, %cst {dimension_numbers = #tpu.dot_dimension_numbers<[1], [0], [0], [1], [0, 0, 1, 1], [], []>} : vector<64x16xf32>, vector<16x128xf32>, vector<64x128xf32> -> vector<64x128xf32>
    %5 = vector.broadcast %2 : vector<1x128xf32> to vector<64x128xf32>
    %6 = arith.addf %4, %5 : vector<64x128xf32>
    %c0_7 = arith.constant 0 : index
    %c0_8 = arith.constant 0 : index
    %c0_9 = arith.constant 0 : index
    %7 = vector.load %arg1[%c0_7, %c0_8, %c0_9] : memref<2x8x32xf32, #tpu.memory_space<vmem>>, vector<1x8x32xf32>
    %8 = vector.shape_cast %7 : vector<1x8x32xf32> to vector<8x32xf32>
    %c0_10 = arith.constant 0 : index
    %c0_11 = arith.constant 0 : index
    %c0_12 = arith.constant 0 : index
    %9 = vector.load %arg2[%c0_10, %c0_11, %c0_12] : memref<2x8x32xf32, #tpu.memory_space<vmem>>, vector<1x8x32xf32>
    %10 = vector.shape_cast %9 : vector<1x8x32xf32> to vector<8x32xf32>
    %11 = vector.extract_strided_slice %6 {offsets = [0, 0], sizes = [8, 128], strides = [1, 1]} : vector<64x128xf32> to vector<8x128xf32>
    %cst_13 = arith.constant dense<0.000000e+00> : vector<8x128xf32>
    %12 = tpu.matmul %8, %1, %cst_13 {dimension_numbers = #tpu.dot_dimension_numbers<[1], [0], [0], [1], [0, 0, 1, 1], [], []>} : vector<8x32xf32>, vector<32x128xf32>, vector<8x128xf32> -> vector<8x128xf32>
    %13 = arith.addf %11, %12 : vector<8x128xf32>
    %14 = arith.negf %13 : vector<8x128xf32>
    %15 = math.exp %14 : vector<8x128xf32>
    %cst_14 = arith.constant 1.000000e+00 : f32
    %16 = vector.broadcast %cst_14 : f32 to vector<8x128xf32>
    %17 = arith.addf %16, %15 : vector<8x128xf32>
    %18 = arith.divf %16, %17 : vector<8x128xf32>
    %19 = math.tanh %13 : vector<8x128xf32>
    %20 = vector.extract_strided_slice %18 {offsets = [0, 0], sizes = [8, 32], strides = [1, 1]} : vector<8x128xf32> to vector<8x32xf32>
    %21 = vector.extract_strided_slice %18 {offsets = [0, 32], sizes = [8, 32], strides = [1, 1]} : vector<8x128xf32> to vector<8x32xf32>
    %22 = vector.extract_strided_slice %19 {offsets = [0, 64], sizes = [8, 32], strides = [1, 1]} : vector<8x128xf32> to vector<8x32xf32>
    %23 = vector.extract_strided_slice %18 {offsets = [0, 96], sizes = [8, 32], strides = [1, 1]} : vector<8x128xf32> to vector<8x32xf32>
    %24 = arith.mulf %21, %10 : vector<8x32xf32>
    %25 = arith.mulf %20, %22 : vector<8x32xf32>
    %26 = arith.addf %24, %25 : vector<8x32xf32>
    %27 = math.tanh %26 : vector<8x32xf32>
    %28 = arith.mulf %23, %27 : vector<8x32xf32>
    %c0_15 = arith.constant 0 : index
    %c0_16 = arith.constant 0 : index
    %29 = vector.load %arg14[%c0_15, %c0_16] : memref<64x32xf32, #tpu.memory_space<vmem>>, vector<8x32xf32>
    tpu.vector_store %arg14[%c0_15, %c0_16], %28 {strides = array<i32>} : memref<64x32xf32, #tpu.memory_space<vmem>>, vector<8x32xf32>,
    %30 = vector.extract_strided_slice %6 {offsets = [8, 0], sizes = [8, 128], strides = [1, 1]} : vector<64x128xf32> to vector<8x128xf32>
    %cst_17 = arith.constant dense<0.000000e+00> : vector<8x128xf32>
    %31 = tpu.matmul %28, %1, %cst_17 {dimension_numbers = #tpu.dot_dimension_numbers<[1], [0], [0], [1], [0, 0, 1, 1], [], []>} : vector<8x32xf32>, vector<32x128xf32>, vector<8x128xf32> -> vector<8x128xf32>
    %32 = arith.addf %30, %31 : vector<8x128xf32>
    %33 = arith.negf %32 : vector<8x128xf32>
    %34 = math.exp %33 : vector<8x128xf32>
    %cst_18 = arith.constant 1.000000e+00 : f32
    %35 = vector.broadcast %cst_18 : f32 to vector<8x128xf32>
    %36 = arith.addf %35, %34 : vector<8x128xf32>
    %37 = arith.divf %35, %36 : vector<8x128xf32>
    %38 = math.tanh %32 : vector<8x128xf32>
    %39 = vector.extract_strided_slice %37 {offsets = [0, 0], sizes = [8, 32], strides = [1, 1]} : vector<8x128xf32> to vector<8x32xf32>
    %40 = vector.extract_strided_slice %37 {offsets = [0, 32], sizes = [8, 32], strides = [1, 1]} : vector<8x128xf32> to vector<8x32xf32>
    %41 = vector.extract_strided_slice %38 {offsets = [0, 64], sizes = [8, 32], strides = [1, 1]} : vector<8x128xf32> to vector<8x32xf32>
    %42 = vector.extract_strided_slice %37 {offsets = [0, 96], sizes = [8, 32], strides = [1, 1]} : vector<8x128xf32> to vector<8x32xf32>
    %43 = arith.mulf %40, %26 : vector<8x32xf32>
    %44 = arith.mulf %39, %41 : vector<8x32xf32>
    %45 = arith.addf %43, %44 : vector<8x32xf32>
    %46 = math.tanh %45 : vector<8x32xf32>
    %47 = arith.mulf %42, %46 : vector<8x32xf32>
    %c8 = arith.constant 8 : index
    %c0_19 = arith.constant 0 : index
    %48 = vector.load %arg14[%c8, %c0_19] : memref<64x32xf32, #tpu.memory_space<vmem>>, vector<8x32xf32>
    tpu.vector_store %arg14[%c8, %c0_19], %47 {strides = array<i32>} : memref<64x32xf32, #tpu.memory_space<vmem>>, vector<8x32xf32>,
    %49 = vector.extract_strided_slice %6 {offsets = [16, 0], sizes = [8, 128], strides = [1, 1]} : vector<64x128xf32> to vector<8x128xf32>
    %cst_20 = arith.constant dense<0.000000e+00> : vector<8x128xf32>
    %50 = tpu.matmul %47, %1, %cst_20 {dimension_numbers = #tpu.dot_dimension_numbers<[1], [0], [0], [1], [0, 0, 1, 1], [], []>} : vector<8x32xf32>, vector<32x128xf32>, vector<8x128xf32> -> vector<8x128xf32>
    %51 = arith.addf %49, %50 : vector<8x128xf32>
    %52 = arith.negf %51 : vector<8x128xf32>
    %53 = math.exp %52 : vector<8x128xf32>
    %cst_21 = arith.constant 1.000000e+00 : f32
    %54 = vector.broadcast %cst_21 : f32 to vector<8x128xf32>
    %55 = arith.addf %54, %53 : vector<8x128xf32>
    %56 = arith.divf %54, %55 : vector<8x128xf32>
    %57 = math.tanh %51 : vector<8x128xf32>
    %58 = vector.extract_strided_slice %56 {offsets = [0, 0], sizes = [8, 32], strides = [1, 1]} : vector<8x128xf32> to vector<8x32xf32>
    %59 = vector.extract_strided_slice %56 {offsets = [0, 32], sizes = [8, 32], strides = [1, 1]} : vector<8x128xf32> to vector<8x32xf32>
    %60 = vector.extract_strided_slice %57 {offsets = [0, 64], sizes = [8, 32], strides = [1, 1]} : vector<8x128xf32> to vector<8x32xf32>
    %61 = vector.extract_strided_slice %56 {offsets = [0, 96], sizes = [8, 32], strides = [1, 1]} : vector<8x128xf32> to vector<8x32xf32>
    %62 = arith.mulf %59, %45 : vector<8x32xf32>
    %63 = arith.mulf %58, %60 : vector<8x32xf32>
    %64 = arith.addf %62, %63 : vector<8x32xf32>
    %65 = math.tanh %64 : vector<8x32xf32>
    %66 = arith.mulf %61, %65 : vector<8x32xf32>
    %c16 = arith.constant 16 : index
    %c0_22 = arith.constant 0 : index
    %67 = vector.load %arg14[%c16, %c0_22] : memref<64x32xf32, #tpu.memory_space<vmem>>, vector<8x32xf32>
    tpu.vector_store %arg14[%c16, %c0_22], %66 {strides = array<i32>} : memref<64x32xf32, #tpu.memory_space<vmem>>, vector<8x32xf32>,
    %68 = vector.extract_strided_slice %6 {offsets = [24, 0], sizes = [8, 128], strides = [1, 1]} : vector<64x128xf32> to vector<8x128xf32>
    %cst_23 = arith.constant dense<0.000000e+00> : vector<8x128xf32>
    %69 = tpu.matmul %66, %1, %cst_23 {dimension_numbers = #tpu.dot_dimension_numbers<[1], [0], [0], [1], [0, 0, 1, 1], [], []>} : vector<8x32xf32>, vector<32x128xf32>, vector<8x128xf32> -> vector<8x128xf32>
    %70 = arith.addf %68, %69 : vector<8x128xf32>
    %71 = arith.negf %70 : vector<8x128xf32>
    %72 = math.exp %71 : vector<8x128xf32>
    %cst_24 = arith.constant 1.000000e+00 : f32
    %73 = vector.broadcast %cst_24 : f32 to vector<8x128xf32>
    %74 = arith.addf %73, %72 : vector<8x128xf32>
    %75 = arith.divf %73, %74 : vector<8x128xf32>
    %76 = math.tanh %70 : vector<8x128xf32>
    %77 = vector.extract_strided_slice %75 {offsets = [0, 0], sizes = [8, 32], strides = [1, 1]} : vector<8x128xf32> to vector<8x32xf32>
    %78 = vector.extract_strided_slice %75 {offsets = [0, 32], sizes = [8, 32], strides = [1, 1]} : vector<8x128xf32> to vector<8x32xf32>
    %79 = vector.extract_strided_slice %76 {offsets = [0, 64], sizes = [8, 32], strides = [1, 1]} : vector<8x128xf32> to vector<8x32xf32>
    %80 = vector.extract_strided_slice %75 {offsets = [0, 96], sizes = [8, 32], strides = [1, 1]} : vector<8x128xf32> to vector<8x32xf32>
    %81 = arith.mulf %78, %64 : vector<8x32xf32>
    %82 = arith.mulf %77, %79 : vector<8x32xf32>
    %83 = arith.addf %81, %82 : vector<8x32xf32>
    %84 = math.tanh %83 : vector<8x32xf32>
    %85 = arith.mulf %80, %84 : vector<8x32xf32>
    %c24 = arith.constant 24 : index
    %c0_25 = arith.constant 0 : index
    %86 = vector.load %arg14[%c24, %c0_25] : memref<64x32xf32, #tpu.memory_space<vmem>>, vector<8x32xf32>
    tpu.vector_store %arg14[%c24, %c0_25], %85 {strides = array<i32>} : memref<64x32xf32, #tpu.memory_space<vmem>>, vector<8x32xf32>,
    %87 = vector.extract_strided_slice %6 {offsets = [32, 0], sizes = [8, 128], strides = [1, 1]} : vector<64x128xf32> to vector<8x128xf32>
    %cst_26 = arith.constant dense<0.000000e+00> : vector<8x128xf32>
    %88 = tpu.matmul %85, %1, %cst_26 {dimension_numbers = #tpu.dot_dimension_numbers<[1], [0], [0], [1], [0, 0, 1, 1], [], []>} : vector<8x32xf32>, vector<32x128xf32>, vector<8x128xf32> -> vector<8x128xf32>
    %89 = arith.addf %87, %88 : vector<8x128xf32>
    %90 = arith.negf %89 : vector<8x128xf32>
    %91 = math.exp %90 : vector<8x128xf32>
    %cst_27 = arith.constant 1.000000e+00 : f32
    %92 = vector.broadcast %cst_27 : f32 to vector<8x128xf32>
    %93 = arith.addf %92, %91 : vector<8x128xf32>
    %94 = arith.divf %92, %93 : vector<8x128xf32>
    %95 = math.tanh %89 : vector<8x128xf32>
    %96 = vector.extract_strided_slice %94 {offsets = [0, 0], sizes = [8, 32], strides = [1, 1]} : vector<8x128xf32> to vector<8x32xf32>
    %97 = vector.extract_strided_slice %94 {offsets = [0, 32], sizes = [8, 32], strides = [1, 1]} : vector<8x128xf32> to vector<8x32xf32>
    %98 = vector.extract_strided_slice %95 {offsets = [0, 64], sizes = [8, 32], strides = [1, 1]} : vector<8x128xf32> to vector<8x32xf32>
    %99 = vector.extract_strided_slice %94 {offsets = [0, 96], sizes = [8, 32], strides = [1, 1]} : vector<8x128xf32> to vector<8x32xf32>
    %100 = arith.mulf %97, %83 : vector<8x32xf32>
    %101 = arith.mulf %96, %98 : vector<8x32xf32>
    %102 = arith.addf %100, %101 : vector<8x32xf32>
    %103 = math.tanh %102 : vector<8x32xf32>
    %104 = arith.mulf %99, %103 : vector<8x32xf32>
    %c32 = arith.constant 32 : index
    %c0_28 = arith.constant 0 : index
    %105 = vector.load %arg14[%c32, %c0_28] : memref<64x32xf32, #tpu.memory_space<vmem>>, vector<8x32xf32>
    tpu.vector_store %arg14[%c32, %c0_28], %104 {strides = array<i32>} : memref<64x32xf32, #tpu.memory_space<vmem>>, vector<8x32xf32>,
    %106 = vector.extract_strided_slice %6 {offsets = [40, 0], sizes = [8, 128], strides = [1, 1]} : vector<64x128xf32> to vector<8x128xf32>
    %cst_29 = arith.constant dense<0.000000e+00> : vector<8x128xf32>
    %107 = tpu.matmul %104, %1, %cst_29 {dimension_numbers = #tpu.dot_dimension_numbers<[1], [0], [0], [1], [0, 0, 1, 1], [], []>} : vector<8x32xf32>, vector<32x128xf32>, vector<8x128xf32> -> vector<8x128xf32>
    %108 = arith.addf %106, %107 : vector<8x128xf32>
    %109 = arith.negf %108 : vector<8x128xf32>
    %110 = math.exp %109 : vector<8x128xf32>
    %cst_30 = arith.constant 1.000000e+00 : f32
    %111 = vector.broadcast %cst_30 : f32 to vector<8x128xf32>
    %112 = arith.addf %111, %110 : vector<8x128xf32>
    %113 = arith.divf %111, %112 : vector<8x128xf32>
    %114 = math.tanh %108 : vector<8x128xf32>
    %115 = vector.extract_strided_slice %113 {offsets = [0, 0], sizes = [8, 32], strides = [1, 1]} : vector<8x128xf32> to vector<8x32xf32>
    %116 = vector.extract_strided_slice %113 {offsets = [0, 32], sizes = [8, 32], strides = [1, 1]} : vector<8x128xf32> to vector<8x32xf32>
    %117 = vector.extract_strided_slice %114 {offsets = [0, 64], sizes = [8, 32], strides = [1, 1]} : vector<8x128xf32> to vector<8x32xf32>
    %118 = vector.extract_strided_slice %113 {offsets = [0, 96], sizes = [8, 32], strides = [1, 1]} : vector<8x128xf32> to vector<8x32xf32>
    %119 = arith.mulf %116, %102 : vector<8x32xf32>
    %120 = arith.mulf %115, %117 : vector<8x32xf32>
    %121 = arith.addf %119, %120 : vector<8x32xf32>
    %122 = math.tanh %121 : vector<8x32xf32>
    %123 = arith.mulf %118, %122 : vector<8x32xf32>
    %c40 = arith.constant 40 : index
    %c0_31 = arith.constant 0 : index
    %124 = vector.load %arg14[%c40, %c0_31] : memref<64x32xf32, #tpu.memory_space<vmem>>, vector<8x32xf32>
    tpu.vector_store %arg14[%c40, %c0_31], %123 {strides = array<i32>} : memref<64x32xf32, #tpu.memory_space<vmem>>, vector<8x32xf32>,
    %125 = vector.extract_strided_slice %6 {offsets = [48, 0], sizes = [8, 128], strides = [1, 1]} : vector<64x128xf32> to vector<8x128xf32>
    %cst_32 = arith.constant dense<0.000000e+00> : vector<8x128xf32>
    %126 = tpu.matmul %123, %1, %cst_32 {dimension_numbers = #tpu.dot_dimension_numbers<[1], [0], [0], [1], [0, 0, 1, 1], [], []>} : vector<8x32xf32>, vector<32x128xf32>, vector<8x128xf32> -> vector<8x128xf32>
    %127 = arith.addf %125, %126 : vector<8x128xf32>
    %128 = arith.negf %127 : vector<8x128xf32>
    %129 = math.exp %128 : vector<8x128xf32>
    %cst_33 = arith.constant 1.000000e+00 : f32
    %130 = vector.broadcast %cst_33 : f32 to vector<8x128xf32>
    %131 = arith.addf %130, %129 : vector<8x128xf32>
    %132 = arith.divf %130, %131 : vector<8x128xf32>
    %133 = math.tanh %127 : vector<8x128xf32>
    %134 = vector.extract_strided_slice %132 {offsets = [0, 0], sizes = [8, 32], strides = [1, 1]} : vector<8x128xf32> to vector<8x32xf32>
    %135 = vector.extract_strided_slice %132 {offsets = [0, 32], sizes = [8, 32], strides = [1, 1]} : vector<8x128xf32> to vector<8x32xf32>
    %136 = vector.extract_strided_slice %133 {offsets = [0, 64], sizes = [8, 32], strides = [1, 1]} : vector<8x128xf32> to vector<8x32xf32>
    %137 = vector.extract_strided_slice %132 {offsets = [0, 96], sizes = [8, 32], strides = [1, 1]} : vector<8x128xf32> to vector<8x32xf32>
    %138 = arith.mulf %135, %121 : vector<8x32xf32>
    %139 = arith.mulf %134, %136 : vector<8x32xf32>
    %140 = arith.addf %138, %139 : vector<8x32xf32>
    %141 = math.tanh %140 : vector<8x32xf32>
    %142 = arith.mulf %137, %141 : vector<8x32xf32>
    %c48 = arith.constant 48 : index
    %c0_34 = arith.constant 0 : index
    %143 = vector.load %arg14[%c48, %c0_34] : memref<64x32xf32, #tpu.memory_space<vmem>>, vector<8x32xf32>
    tpu.vector_store %arg14[%c48, %c0_34], %142 {strides = array<i32>} : memref<64x32xf32, #tpu.memory_space<vmem>>, vector<8x32xf32>,
    %144 = vector.extract_strided_slice %6 {offsets = [56, 0], sizes = [8, 128], strides = [1, 1]} : vector<64x128xf32> to vector<8x128xf32>
    %cst_35 = arith.constant dense<0.000000e+00> : vector<8x128xf32>
    %145 = tpu.matmul %142, %1, %cst_35 {dimension_numbers = #tpu.dot_dimension_numbers<[1], [0], [0], [1], [0, 0, 1, 1], [], []>} : vector<8x32xf32>, vector<32x128xf32>, vector<8x128xf32> -> vector<8x128xf32>
    %146 = arith.addf %144, %145 : vector<8x128xf32>
    %147 = arith.negf %146 : vector<8x128xf32>
    %148 = math.exp %147 : vector<8x128xf32>
    %cst_36 = arith.constant 1.000000e+00 : f32
    %149 = vector.broadcast %cst_36 : f32 to vector<8x128xf32>
    %150 = arith.addf %149, %148 : vector<8x128xf32>
    %151 = arith.divf %149, %150 : vector<8x128xf32>
    %152 = math.tanh %146 : vector<8x128xf32>
    %153 = vector.extract_strided_slice %151 {offsets = [0, 0], sizes = [8, 32], strides = [1, 1]} : vector<8x128xf32> to vector<8x32xf32>
    %154 = vector.extract_strided_slice %151 {offsets = [0, 32], sizes = [8, 32], strides = [1, 1]} : vector<8x128xf32> to vector<8x32xf32>
    %155 = vector.extract_strided_slice %152 {offsets = [0, 64], sizes = [8, 32], strides = [1, 1]} : vector<8x128xf32> to vector<8x32xf32>
    %156 = vector.extract_strided_slice %151 {offsets = [0, 96], sizes = [8, 32], strides = [1, 1]} : vector<8x128xf32> to vector<8x32xf32>
    %157 = arith.mulf %154, %140 : vector<8x32xf32>
    %158 = arith.mulf %153, %155 : vector<8x32xf32>
    %159 = arith.addf %157, %158 : vector<8x32xf32>
    %160 = math.tanh %159 : vector<8x32xf32>
    %161 = arith.mulf %156, %160 : vector<8x32xf32>
    %c56 = arith.constant 56 : index
    %c0_37 = arith.constant 0 : index
    %162 = vector.load %arg14[%c56, %c0_37] : memref<64x32xf32, #tpu.memory_space<vmem>>, vector<8x32xf32>
    tpu.vector_store %arg14[%c56, %c0_37], %161 {strides = array<i32>} : memref<64x32xf32, #tpu.memory_space<vmem>>, vector<8x32xf32>,
    %c0_38 = arith.constant 0 : index
    %c0_39 = arith.constant 0 : index
    %c0_40 = arith.constant 0 : index
    %163 = vector.load %arg11[%c0_38, %c0_39, %c0_40] : memref<2x8x32xf32, #tpu.memory_space<vmem>>, vector<1x8x32xf32>
    %164 = vector.shape_cast %163 : vector<1x8x32xf32> to vector<8x32xf32>
    %165 = vector.shape_cast %161 : vector<8x32xf32> to vector<1x8x32xf32>
    tpu.vector_store %arg11[%c0_38, %c0_39, %c0_40], %165 {strides = array<i32>} : memref<2x8x32xf32, #tpu.memory_space<vmem>>, vector<1x8x32xf32>,
    %c0_41 = arith.constant 0 : index
    %c0_42 = arith.constant 0 : index
    %c0_43 = arith.constant 0 : index
    %166 = vector.load %arg12[%c0_41, %c0_42, %c0_43] : memref<2x8x32xf32, #tpu.memory_space<vmem>>, vector<1x8x32xf32>
    %167 = vector.shape_cast %166 : vector<1x8x32xf32> to vector<8x32xf32>
    %168 = vector.shape_cast %159 : vector<8x32xf32> to vector<1x8x32xf32>
    tpu.vector_store %arg12[%c0_41, %c0_42, %c0_43], %168 {strides = array<i32>} : memref<2x8x32xf32, #tpu.memory_space<vmem>>, vector<1x8x32xf32>,
    %c0_44 = arith.constant 0 : index
    %c0_45 = arith.constant 0 : index
    %169 = vector.load %arg6[%c0_44, %c0_45] : memref<32x128xf32, #tpu.memory_space<vmem>>, vector<32x128xf32>
    %c0_46 = arith.constant 0 : index
    %c0_47 = arith.constant 0 : index
    %170 = vector.load %arg7[%c0_46, %c0_47] : memref<32x128xf32, #tpu.memory_space<vmem>>, vector<32x128xf32>
    %c0_48 = arith.constant 0 : index
    %c0_49 = arith.constant 0 : index
    %171 = vector.load %arg8[%c0_48, %c0_49] : memref<1x128xf32, #tpu.memory_space<vmem>>, vector<1x128xf32>
    %c0_50 = arith.constant 0 : index
    %c0_51 = arith.constant 0 : index
    %172 = vector.load %arg14[%c0_50, %c0_51] : memref<64x32xf32, #tpu.memory_space<vmem>>, vector<64x32xf32>
    %cst_52 = arith.constant dense<0.000000e+00> : vector<64x128xf32>
    %173 = tpu.matmul %172, %169, %cst_52 {dimension_numbers = #tpu.dot_dimension_numbers<[1], [0], [0], [1], [0, 0, 1, 1], [], []>} : vector<64x32xf32>, vector<32x128xf32>, vector<64x128xf32> -> vector<64x128xf32>
    %174 = vector.broadcast %171 : vector<1x128xf32> to vector<64x128xf32>
    %175 = arith.addf %173, %174 : vector<64x128xf32>
    %c1 = arith.constant 1 : index
    %c0_53 = arith.constant 0 : index
    %c0_54 = arith.constant 0 : index
    %176 = vector.load %arg1[%c1, %c0_53, %c0_54] : memref<2x8x32xf32, #tpu.memory_space<vmem>>, vector<1x8x32xf32>
    %177 = vector.shape_cast %176 : vector<1x8x32xf32> to vector<8x32xf32>
    %c1_55 = arith.constant 1 : index
    %c0_56 = arith.constant 0 : index
    %c0_57 = arith.constant 0 : index
    %178 = vector.load %arg2[%c1_55, %c0_56, %c0_57] : memref<2x8x32xf32, #tpu.memory_space<vmem>>, vector<1x8x32xf32>
    %179 = vector.shape_cast %178 : vector<1x8x32xf32> to vector<8x32xf32>
    %180 = vector.extract_strided_slice %175 {offsets = [0, 0], sizes = [8, 128], strides = [1, 1]} : vector<64x128xf32> to vector<8x128xf32>
    %cst_58 = arith.constant dense<0.000000e+00> : vector<8x128xf32>
    %181 = tpu.matmul %177, %170, %cst_58 {dimension_numbers = #tpu.dot_dimension_numbers<[1], [0], [0], [1], [0, 0, 1, 1], [], []>} : vector<8x32xf32>, vector<32x128xf32>, vector<8x128xf32> -> vector<8x128xf32>
    %182 = arith.addf %180, %181 : vector<8x128xf32>
    %183 = arith.negf %182 : vector<8x128xf32>
    %184 = math.exp %183 : vector<8x128xf32>
    %cst_59 = arith.constant 1.000000e+00 : f32
    %185 = vector.broadcast %cst_59 : f32 to vector<8x128xf32>
    %186 = arith.addf %185, %184 : vector<8x128xf32>
    %187 = arith.divf %185, %186 : vector<8x128xf32>
    %188 = math.tanh %182 : vector<8x128xf32>
    %189 = vector.extract_strided_slice %187 {offsets = [0, 0], sizes = [8, 32], strides = [1, 1]} : vector<8x128xf32> to vector<8x32xf32>
    %190 = vector.extract_strided_slice %187 {offsets = [0, 32], sizes = [8, 32], strides = [1, 1]} : vector<8x128xf32> to vector<8x32xf32>
    %191 = vector.extract_strided_slice %188 {offsets = [0, 64], sizes = [8, 32], strides = [1, 1]} : vector<8x128xf32> to vector<8x32xf32>
    %192 = vector.extract_strided_slice %187 {offsets = [0, 96], sizes = [8, 32], strides = [1, 1]} : vector<8x128xf32> to vector<8x32xf32>
    %193 = arith.mulf %190, %179 : vector<8x32xf32>
    %194 = arith.mulf %189, %191 : vector<8x32xf32>
    %195 = arith.addf %193, %194 : vector<8x32xf32>
    %196 = math.tanh %195 : vector<8x32xf32>
    %197 = arith.mulf %192, %196 : vector<8x32xf32>
    %198 = vector.extract_strided_slice %175 {offsets = [8, 0], sizes = [8, 128], strides = [1, 1]} : vector<64x128xf32> to vector<8x128xf32>
    %cst_60 = arith.constant dense<0.000000e+00> : vector<8x128xf32>
    %199 = tpu.matmul %197, %170, %cst_60 {dimension_numbers = #tpu.dot_dimension_numbers<[1], [0], [0], [1], [0, 0, 1, 1], [], []>} : vector<8x32xf32>, vector<32x128xf32>, vector<8x128xf32> -> vector<8x128xf32>
    %200 = arith.addf %198, %199 : vector<8x128xf32>
    %201 = arith.negf %200 : vector<8x128xf32>
    %202 = math.exp %201 : vector<8x128xf32>
    %cst_61 = arith.constant 1.000000e+00 : f32
    %203 = vector.broadcast %cst_61 : f32 to vector<8x128xf32>
    %204 = arith.addf %203, %202 : vector<8x128xf32>
    %205 = arith.divf %203, %204 : vector<8x128xf32>
    %206 = math.tanh %200 : vector<8x128xf32>
    %207 = vector.extract_strided_slice %205 {offsets = [0, 0], sizes = [8, 32], strides = [1, 1]} : vector<8x128xf32> to vector<8x32xf32>
    %208 = vector.extract_strided_slice %205 {offsets = [0, 32], sizes = [8, 32], strides = [1, 1]} : vector<8x128xf32> to vector<8x32xf32>
    %209 = vector.extract_strided_slice %206 {offsets = [0, 64], sizes = [8, 32], strides = [1, 1]} : vector<8x128xf32> to vector<8x32xf32>
    %210 = vector.extract_strided_slice %205 {offsets = [0, 96], sizes = [8, 32], strides = [1, 1]} : vector<8x128xf32> to vector<8x32xf32>
    %211 = arith.mulf %208, %195 : vector<8x32xf32>
    %212 = arith.mulf %207, %209 : vector<8x32xf32>
    %213 = arith.addf %211, %212 : vector<8x32xf32>
    %214 = math.tanh %213 : vector<8x32xf32>
    %215 = arith.mulf %210, %214 : vector<8x32xf32>
    %216 = vector.extract_strided_slice %175 {offsets = [16, 0], sizes = [8, 128], strides = [1, 1]} : vector<64x128xf32> to vector<8x128xf32>
    %cst_62 = arith.constant dense<0.000000e+00> : vector<8x128xf32>
    %217 = tpu.matmul %215, %170, %cst_62 {dimension_numbers = #tpu.dot_dimension_numbers<[1], [0], [0], [1], [0, 0, 1, 1], [], []>} : vector<8x32xf32>, vector<32x128xf32>, vector<8x128xf32> -> vector<8x128xf32>
    %218 = arith.addf %216, %217 : vector<8x128xf32>
    %219 = arith.negf %218 : vector<8x128xf32>
    %220 = math.exp %219 : vector<8x128xf32>
    %cst_63 = arith.constant 1.000000e+00 : f32
    %221 = vector.broadcast %cst_63 : f32 to vector<8x128xf32>
    %222 = arith.addf %221, %220 : vector<8x128xf32>
    %223 = arith.divf %221, %222 : vector<8x128xf32>
    %224 = math.tanh %218 : vector<8x128xf32>
    %225 = vector.extract_strided_slice %223 {offsets = [0, 0], sizes = [8, 32], strides = [1, 1]} : vector<8x128xf32> to vector<8x32xf32>
    %226 = vector.extract_strided_slice %223 {offsets = [0, 32], sizes = [8, 32], strides = [1, 1]} : vector<8x128xf32> to vector<8x32xf32>
    %227 = vector.extract_strided_slice %224 {offsets = [0, 64], sizes = [8, 32], strides = [1, 1]} : vector<8x128xf32> to vector<8x32xf32>
    %228 = vector.extract_strided_slice %223 {offsets = [0, 96], sizes = [8, 32], strides = [1, 1]} : vector<8x128xf32> to vector<8x32xf32>
    %229 = arith.mulf %226, %213 : vector<8x32xf32>
    %230 = arith.mulf %225, %227 : vector<8x32xf32>
    %231 = arith.addf %229, %230 : vector<8x32xf32>
    %232 = math.tanh %231 : vector<8x32xf32>
    %233 = arith.mulf %228, %232 : vector<8x32xf32>
    %234 = vector.extract_strided_slice %175 {offsets = [24, 0], sizes = [8, 128], strides = [1, 1]} : vector<64x128xf32> to vector<8x128xf32>
    %cst_64 = arith.constant dense<0.000000e+00> : vector<8x128xf32>
    %235 = tpu.matmul %233, %170, %cst_64 {dimension_numbers = #tpu.dot_dimension_numbers<[1], [0], [0], [1], [0, 0, 1, 1], [], []>} : vector<8x32xf32>, vector<32x128xf32>, vector<8x128xf32> -> vector<8x128xf32>
    %236 = arith.addf %234, %235 : vector<8x128xf32>
    %237 = arith.negf %236 : vector<8x128xf32>
    %238 = math.exp %237 : vector<8x128xf32>
    %cst_65 = arith.constant 1.000000e+00 : f32
    %239 = vector.broadcast %cst_65 : f32 to vector<8x128xf32>
    %240 = arith.addf %239, %238 : vector<8x128xf32>
    %241 = arith.divf %239, %240 : vector<8x128xf32>
    %242 = math.tanh %236 : vector<8x128xf32>
    %243 = vector.extract_strided_slice %241 {offsets = [0, 0], sizes = [8, 32], strides = [1, 1]} : vector<8x128xf32> to vector<8x32xf32>
    %244 = vector.extract_strided_slice %241 {offsets = [0, 32], sizes = [8, 32], strides = [1, 1]} : vector<8x128xf32> to vector<8x32xf32>
    %245 = vector.extract_strided_slice %242 {offsets = [0, 64], sizes = [8, 32], strides = [1, 1]} : vector<8x128xf32> to vector<8x32xf32>
    %246 = vector.extract_strided_slice %241 {offsets = [0, 96], sizes = [8, 32], strides = [1, 1]} : vector<8x128xf32> to vector<8x32xf32>
    %247 = arith.mulf %244, %231 : vector<8x32xf32>
    %248 = arith.mulf %243, %245 : vector<8x32xf32>
    %249 = arith.addf %247, %248 : vector<8x32xf32>
    %250 = math.tanh %249 : vector<8x32xf32>
    %251 = arith.mulf %246, %250 : vector<8x32xf32>
    %252 = vector.extract_strided_slice %175 {offsets = [32, 0], sizes = [8, 128], strides = [1, 1]} : vector<64x128xf32> to vector<8x128xf32>
    %cst_66 = arith.constant dense<0.000000e+00> : vector<8x128xf32>
    %253 = tpu.matmul %251, %170, %cst_66 {dimension_numbers = #tpu.dot_dimension_numbers<[1], [0], [0], [1], [0, 0, 1, 1], [], []>} : vector<8x32xf32>, vector<32x128xf32>, vector<8x128xf32> -> vector<8x128xf32>
    %254 = arith.addf %252, %253 : vector<8x128xf32>
    %255 = arith.negf %254 : vector<8x128xf32>
    %256 = math.exp %255 : vector<8x128xf32>
    %cst_67 = arith.constant 1.000000e+00 : f32
    %257 = vector.broadcast %cst_67 : f32 to vector<8x128xf32>
    %258 = arith.addf %257, %256 : vector<8x128xf32>
    %259 = arith.divf %257, %258 : vector<8x128xf32>
    %260 = math.tanh %254 : vector<8x128xf32>
    %261 = vector.extract_strided_slice %259 {offsets = [0, 0], sizes = [8, 32], strides = [1, 1]} : vector<8x128xf32> to vector<8x32xf32>
    %262 = vector.extract_strided_slice %259 {offsets = [0, 32], sizes = [8, 32], strides = [1, 1]} : vector<8x128xf32> to vector<8x32xf32>
    %263 = vector.extract_strided_slice %260 {offsets = [0, 64], sizes = [8, 32], strides = [1, 1]} : vector<8x128xf32> to vector<8x32xf32>
    %264 = vector.extract_strided_slice %259 {offsets = [0, 96], sizes = [8, 32], strides = [1, 1]} : vector<8x128xf32> to vector<8x32xf32>
    %265 = arith.mulf %262, %249 : vector<8x32xf32>
    %266 = arith.mulf %261, %263 : vector<8x32xf32>
    %267 = arith.addf %265, %266 : vector<8x32xf32>
    %268 = math.tanh %267 : vector<8x32xf32>
    %269 = arith.mulf %264, %268 : vector<8x32xf32>
    %270 = vector.extract_strided_slice %175 {offsets = [40, 0], sizes = [8, 128], strides = [1, 1]} : vector<64x128xf32> to vector<8x128xf32>
    %cst_68 = arith.constant dense<0.000000e+00> : vector<8x128xf32>
    %271 = tpu.matmul %269, %170, %cst_68 {dimension_numbers = #tpu.dot_dimension_numbers<[1], [0], [0], [1], [0, 0, 1, 1], [], []>} : vector<8x32xf32>, vector<32x128xf32>, vector<8x128xf32> -> vector<8x128xf32>
    %272 = arith.addf %270, %271 : vector<8x128xf32>
    %273 = arith.negf %272 : vector<8x128xf32>
    %274 = math.exp %273 : vector<8x128xf32>
    %cst_69 = arith.constant 1.000000e+00 : f32
    %275 = vector.broadcast %cst_69 : f32 to vector<8x128xf32>
    %276 = arith.addf %275, %274 : vector<8x128xf32>
    %277 = arith.divf %275, %276 : vector<8x128xf32>
    %278 = math.tanh %272 : vector<8x128xf32>
    %279 = vector.extract_strided_slice %277 {offsets = [0, 0], sizes = [8, 32], strides = [1, 1]} : vector<8x128xf32> to vector<8x32xf32>
    %280 = vector.extract_strided_slice %277 {offsets = [0, 32], sizes = [8, 32], strides = [1, 1]} : vector<8x128xf32> to vector<8x32xf32>
    %281 = vector.extract_strided_slice %278 {offsets = [0, 64], sizes = [8, 32], strides = [1, 1]} : vector<8x128xf32> to vector<8x32xf32>
    %282 = vector.extract_strided_slice %277 {offsets = [0, 96], sizes = [8, 32], strides = [1, 1]} : vector<8x128xf32> to vector<8x32xf32>
    %283 = arith.mulf %280, %267 : vector<8x32xf32>
    %284 = arith.mulf %279, %281 : vector<8x32xf32>
    %285 = arith.addf %283, %284 : vector<8x32xf32>
    %286 = math.tanh %285 : vector<8x32xf32>
    %287 = arith.mulf %282, %286 : vector<8x32xf32>
    %288 = vector.extract_strided_slice %175 {offsets = [48, 0], sizes = [8, 128], strides = [1, 1]} : vector<64x128xf32> to vector<8x128xf32>
    %cst_70 = arith.constant dense<0.000000e+00> : vector<8x128xf32>
    %289 = tpu.matmul %287, %170, %cst_70 {dimension_numbers = #tpu.dot_dimension_numbers<[1], [0], [0], [1], [0, 0, 1, 1], [], []>} : vector<8x32xf32>, vector<32x128xf32>, vector<8x128xf32> -> vector<8x128xf32>
    %290 = arith.addf %288, %289 : vector<8x128xf32>
    %291 = arith.negf %290 : vector<8x128xf32>
    %292 = math.exp %291 : vector<8x128xf32>
    %cst_71 = arith.constant 1.000000e+00 : f32
    %293 = vector.broadcast %cst_71 : f32 to vector<8x128xf32>
    %294 = arith.addf %293, %292 : vector<8x128xf32>
    %295 = arith.divf %293, %294 : vector<8x128xf32>
    %296 = math.tanh %290 : vector<8x128xf32>
    %297 = vector.extract_strided_slice %295 {offsets = [0, 0], sizes = [8, 32], strides = [1, 1]} : vector<8x128xf32> to vector<8x32xf32>
    %298 = vector.extract_strided_slice %295 {offsets = [0, 32], sizes = [8, 32], strides = [1, 1]} : vector<8x128xf32> to vector<8x32xf32>
    %299 = vector.extract_strided_slice %296 {offsets = [0, 64], sizes = [8, 32], strides = [1, 1]} : vector<8x128xf32> to vector<8x32xf32>
    %300 = vector.extract_strided_slice %295 {offsets = [0, 96], sizes = [8, 32], strides = [1, 1]} : vector<8x128xf32> to vector<8x32xf32>
    %301 = arith.mulf %298, %285 : vector<8x32xf32>
    %302 = arith.mulf %297, %299 : vector<8x32xf32>
    %303 = arith.addf %301, %302 : vector<8x32xf32>
    %304 = math.tanh %303 : vector<8x32xf32>
    %305 = arith.mulf %300, %304 : vector<8x32xf32>
    %306 = vector.extract_strided_slice %175 {offsets = [56, 0], sizes = [8, 128], strides = [1, 1]} : vector<64x128xf32> to vector<8x128xf32>
    %cst_72 = arith.constant dense<0.000000e+00> : vector<8x128xf32>
    %307 = tpu.matmul %305, %170, %cst_72 {dimension_numbers = #tpu.dot_dimension_numbers<[1], [0], [0], [1], [0, 0, 1, 1], [], []>} : vector<8x32xf32>, vector<32x128xf32>, vector<8x128xf32> -> vector<8x128xf32>
    %308 = arith.addf %306, %307 : vector<8x128xf32>
    %309 = arith.negf %308 : vector<8x128xf32>
    %310 = math.exp %309 : vector<8x128xf32>
    %cst_73 = arith.constant 1.000000e+00 : f32
    %311 = vector.broadcast %cst_73 : f32 to vector<8x128xf32>
    %312 = arith.addf %311, %310 : vector<8x128xf32>
    %313 = arith.divf %311, %312 : vector<8x128xf32>
    %314 = math.tanh %308 : vector<8x128xf32>
    %315 = vector.extract_strided_slice %313 {offsets = [0, 0], sizes = [8, 32], strides = [1, 1]} : vector<8x128xf32> to vector<8x32xf32>
    %316 = vector.extract_strided_slice %313 {offsets = [0, 32], sizes = [8, 32], strides = [1, 1]} : vector<8x128xf32> to vector<8x32xf32>
    %317 = vector.extract_strided_slice %314 {offsets = [0, 64], sizes = [8, 32], strides = [1, 1]} : vector<8x128xf32> to vector<8x32xf32>
    %318 = vector.extract_strided_slice %313 {offsets = [0, 96], sizes = [8, 32], strides = [1, 1]} : vector<8x128xf32> to vector<8x32xf32>
    %319 = arith.mulf %316, %303 : vector<8x32xf32>
    %320 = arith.mulf %315, %317 : vector<8x32xf32>
    %321 = arith.addf %319, %320 : vector<8x32xf32>
    %322 = math.tanh %321 : vector<8x32xf32>
    %323 = arith.mulf %318, %322 : vector<8x32xf32>
    %c1_74 = arith.constant 1 : index
    %c0_75 = arith.constant 0 : index
    %c0_76 = arith.constant 0 : index
    %324 = vector.load %arg11[%c1_74, %c0_75, %c0_76] : memref<2x8x32xf32, #tpu.memory_space<vmem>>, vector<1x8x32xf32>
    %325 = vector.shape_cast %324 : vector<1x8x32xf32> to vector<8x32xf32>
    %326 = vector.shape_cast %323 : vector<8x32xf32> to vector<1x8x32xf32>
    tpu.vector_store %arg11[%c1_74, %c0_75, %c0_76], %326 {strides = array<i32>} : memref<2x8x32xf32, #tpu.memory_space<vmem>>, vector<1x8x32xf32>,
    %c1_77 = arith.constant 1 : index
    %c0_78 = arith.constant 0 : index
    %c0_79 = arith.constant 0 : index
    %327 = vector.load %arg12[%c1_77, %c0_78, %c0_79] : memref<2x8x32xf32, #tpu.memory_space<vmem>>, vector<1x8x32xf32>
    %328 = vector.shape_cast %327 : vector<1x8x32xf32> to vector<8x32xf32>
    %329 = vector.shape_cast %321 : vector<8x32xf32> to vector<1x8x32xf32>
    tpu.vector_store %arg12[%c1_77, %c0_78, %c0_79], %329 {strides = array<i32>} : memref<2x8x32xf32, #tpu.memory_space<vmem>>, vector<1x8x32xf32>,
    %c0_80 = arith.constant 0 : index
    %c0_81 = arith.constant 0 : index
    %330 = vector.load %arg9[%c0_80, %c0_81] : memref<32x128xf32, #tpu.memory_space<vmem>>, vector<32x128xf32>
    %cst_82 = arith.constant dense<0.000000e+00> : vector<8x128xf32>
    %331 = tpu.matmul %323, %330, %cst_82 {dimension_numbers = #tpu.dot_dimension_numbers<[1], [0], [0], [1], [0, 0, 1, 1], [], []>} : vector<8x32xf32>, vector<32x128xf32>, vector<8x128xf32> -> vector<8x128xf32>
    %c0_83 = arith.constant 0 : index
    %c0_84 = arith.constant 0 : index
    %332 = vector.load %arg10[%c0_83, %c0_84] : memref<1x128xf32, #tpu.memory_space<vmem>>, vector<1x128xf32>
    %333 = vector.broadcast %332 : vector<1x128xf32> to vector<8x128xf32>
    %334 = arith.addf %331, %333 : vector<8x128xf32>
    %c0_85 = arith.constant 0 : index
    %c0_86 = arith.constant 0 : index
    %335 = vector.load %arg13[%c0_85, %c0_86] : memref<8x128xf32, #tpu.memory_space<vmem>>, vector<8x128xf32>
    tpu.vector_store %arg13[%c0_85, %c0_86], %334 {strides = array<i32>} : memref<8x128xf32, #tpu.memory_space<vmem>>, vector<8x128xf32>,
    return
  }
}

</mosaic_0001>

<llo_original>
// kernel: tpu_custom_call.1
$region0: #{tpu_custom_call.1}
  #allocation0 [shape = 'u32[]', space=smem, size = 0x4, offset = 0x4, fixed_abs, tag = 'smem constant byte address 0x4 - core index']
  #allocation1 [shape = 'u32[72,128]{1,0:T(1,128)}', space=vmem, size = 0x9000, scoped, tag = 'internal scratch']
  #allocation2 [shape = 'f32[64,32]{1,0:T(8,128)}', space=vmem, size = 0x8000, scoped, tag = 'scratch operand']
  %s0 = inlined_call_operand.vmem [shape: f32[64,16], index: 0, kind: input, shape index: {}]
  %s1 = inlined_call_operand.vmem [shape: f32[2,8,32], index: 1, kind: input, shape index: {}]
  %s2 = inlined_call_operand.hbm [shape: f32[2,8,32], index: 2, kind: input, shape index: {}]
  %s3 = inlined_call_operand.hbm [shape: f32[16,128], index: 3, kind: input, shape index: {}]
  %s4 = inlined_call_operand.vmem [shape: f32[32,128], index: 4, kind: input, shape index: {}]
  %s5 = inlined_call_operand.vmem [shape: f32[1,128], index: 5, kind: input, shape index: {}]
  %s6 = inlined_call_operand.vmem [shape: f32[32,128], index: 6, kind: input, shape index: {}]
  %s7 = inlined_call_operand.hbm [shape: f32[32,128], index: 7, kind: input, shape index: {}]
  %s8 = inlined_call_operand.vmem [shape: f32[1,128], index: 8, kind: input, shape index: {}]
  %s9 = inlined_call_operand.hbm [shape: f32[32,128], index: 9, kind: input, shape index: {}]
  %s10 = inlined_call_operand.vmem [shape: f32[1,128], index: 10, kind: input, shape index: {}]
  %s11 = inlined_call_operand.hbm [shape: f32[2,8,32], index: 11, kind: output, shape index: {0}]
  %s12 = inlined_call_operand.hbm [shape: f32[2,8,32], index: 12, kind: output, shape index: {1}]
  %s13 = inlined_call_operand.hbm [shape: f32[8,128], index: 13, kind: output, shape index: {2}]
  %14 = xla_tuple %s11, %s12, %s13
  %s15 = sld [smem:[#allocation0]]
  $region86: #{tpu_custom_call.1} parent=0
    _
  %s17 = ssub.s32 1, %s15
  %s18 = scalar_select 0, %s17, %s15
  $region1: #{tpu_custom_call.1} parent=0
    #allocation3 [shape = 'u8[8192]{0}', space=vmem, size = 0x2000, scoped, tag = 'input window, operand 2, single buffered']
    #allocation4 [shape = 's32[1]{0}', space=sflag, size = 0x4, scoped, tag = 'scoped memory for tpu_custom_call.1']
    #allocation5 [shape = 's32[1]{0}', space=sflag, size = 0x4, scoped, tag = 'scoped memory for tpu_custom_call.1']
    #allocation6 [shape = 'u8[8192]{0}', space=vmem, size = 0x2000, scoped, tag = 'input window, operand 3, single buffered']
    #allocation7 [shape = 's32[1]{0}', space=sflag, size = 0x4, scoped, tag = 'scoped memory for tpu_custom_call.1']
    #allocation8 [shape = 'u8[16384]{0}', space=vmem, size = 0x4000, scoped, tag = 'input window, operand 7, single buffered']
    #allocation9 [shape = 'u8[16384]{0}', space=vmem, size = 0x4000, scoped, tag = 'input window, operand 9, single buffered']
    #allocation10 [shape = 's32[1]{0}', space=sflag, size = 0x4, scoped, tag = 'scoped memory for tpu_custom_call.1']
    #allocation11 [shape = 'u8[8192]{0}', space=vmem, size = 0x2000, scoped, tag = 'output window, operand 0, single buffered']
    #allocation12 [shape = 'u8[8192]{0}', space=vmem, size = 0x2000, scoped, tag = 'output window, operand 1, single buffered']
    #allocation13 [shape = 's32[1]{0}', space=sflag, size = 0x4, scoped, tag = 'scoped memory for tpu_custom_call.1']
    #allocation14 [shape = 'u8[4096]{0}', space=vmem, size = 0x1000, scoped, tag = 'output window, operand 2, single buffered']
    %19 = vsyncpa [#allocation4], 0
    %20 = vsyncpa [#allocation7], 0
    %21 = vsyncpa [#allocation10], 0
    %22 = vsyncpa [#allocation5], 0
    %23 = vsyncpa [#allocation13], 0
    // Predicated region
    $region2: #{tpu_custom_call.1} parent=1 // pred_check
      _
    $region3: #{tpu_custom_call.1} parent=1 // pred_check_branch
      %25 = sbr.rel (0) target = $region5
    $region4: #{tpu_custom_call.1} parent=1 // pred_region
      _
    $region5: #{tpu_custom_call.1} parent=1 // pred_fallthru
      _
    // Predicated region
    $region6: #{tpu_custom_call.1} parent=1 // pred_check
      _
    $region7: #{tpu_custom_call.1} parent=1 // pred_check_branch
      %27 = sbr.rel (0) target = $region9
    $region8: #{tpu_custom_call.1} parent=1 // pred_region
      _
    $region9: #{tpu_custom_call.1} parent=1 // pred_fallthru
      _
    // Predicated region
    $region10: #{tpu_custom_call.1} parent=1 // pred_check
      _
    $region11: #{tpu_custom_call.1} parent=1 // pred_check_branch
      %29 = sbr.rel (0) target = $region13
    $region12: #{tpu_custom_call.1} parent=1 // pred_region
      %31 = vsyncadd [#allocation4], 0
      %s32 = sshll.u32 %s2, 4
      %s33 = int_to_ptr.hbm [resolvable:$true] %s32
      %s34 = sshll.u32 [#allocation3], 4
      %s35 = int_to_ptr.vmem [resolvable:$true] %s34
      %40 = dma.hbm_to_vmem [thread:$0]  %s33, 256, %s35, [#allocation4], 128, 128, 8
    $region13: #{tpu_custom_call.1} parent=1 // pred_fallthru
      _
    // Predicated region
    $region14: #{tpu_custom_call.1} parent=1 // pred_check
      _
    $region15: #{tpu_custom_call.1} parent=1 // pred_check_branch
      %42 = sbr.rel (0) target = $region17
    $region16: #{tpu_custom_call.1} parent=1 // pred_region
      %44 = vsyncadd [#allocation7], 0
      %s45 = sshll.u32 %s3, 4
      %s46 = int_to_ptr.hbm [resolvable:$true] %s45
      %s47 = sshll.u32 [#allocation6], 4
      %s48 = int_to_ptr.vmem [resolvable:$true] %s47
      %53 = dma.hbm_to_vmem [thread:$0]  %s46, 256, %s48, [#allocation7], 128, 128, 8
    $region17: #{tpu_custom_call.1} parent=1 // pred_fallthru
      _
    // Predicated region
    $region18: #{tpu_custom_call.1} parent=1 // pred_check
      _
    $region19: #{tpu_custom_call.1} parent=1 // pred_check_branch
      %55 = sbr.rel (0) target = $region21
    $region20: #{tpu_custom_call.1} parent=1 // pred_region
      _
    $region21: #{tpu_custom_call.1} parent=1 // pred_fallthru
      _
    // Predicated region
    $region22: #{tpu_custom_call.1} parent=1 // pred_check
      _
    $region23: #{tpu_custom_call.1} parent=1 // pred_check_branch
      %57 = sbr.rel (0) target = $region25
    $region24: #{tpu_custom_call.1} parent=1 // pred_region
      _
    $region25: #{tpu_custom_call.1} parent=1 // pred_fallthru
      _
    // Predicated region
    $region26: #{tpu_custom_call.1} parent=1 // pred_check
      _
    $region27: #{tpu_custom_call.1} parent=1 // pred_check_branch
      %59 = sbr.rel (0) target = $region29
    $region28: #{tpu_custom_call.1} parent=1 // pred_region
      _
    $region29: #{tpu_custom_call.1} parent=1 // pred_fallthru
      _
    // Predicated region
    $region30: #{tpu_custom_call.1} parent=1 // pred_check
      _
    $region31: #{tpu_custom_call.1} parent=1 // pred_check_branch
      %61 = sbr.rel (0) target = $region33
    $region32: #{tpu_custom_call.1} parent=1 // pred_region
      %63 = vsyncadd [#allocation7], 0
      %s64 = sshll.u32 %s7, 4
      %s65 = int_to_ptr.hbm [resolvable:$true] %s64
      %s66 = sshll.u32 [#allocation8], 4
      %s67 = int_to_ptr.vmem [resolvable:$true] %s66
      %72 = dma.hbm_to_vmem [thread:$0]  %s65, 512, %s67, [#allocation7], 128, 128, 8
    $region33: #{tpu_custom_call.1} parent=1 // pred_fallthru
      _
    // Predicated region
    $region34: #{tpu_custom_call.1} parent=1 // pred_check
      _
    $region35: #{tpu_custom_call.1} parent=1 // pred_check_branch
      %74 = sbr.rel (0) target = $region37
    $region36: #{tpu_custom_call.1} parent=1 // pred_region
      _
    $region37: #{tpu_custom_call.1} parent=1 // pred_fallthru
      _
    // Predicated region
    $region38: #{tpu_custom_call.1} parent=1 // pred_check
      _
    $region39: #{tpu_custom_call.1} parent=1 // pred_check_branch
      %76 = sbr.rel (0) target = $region41
    $region40: #{tpu_custom_call.1} parent=1 // pred_region
      %78 = vsyncadd [#allocation10], 0
      %s79 = sshll.u32 %s9, 4
      %s80 = int_to_ptr.hbm [resolvable:$true] %s79
      %s81 = sshll.u32 [#allocation9], 4
      %s82 = int_to_ptr.vmem [resolvable:$true] %s81
      %87 = dma.hbm_to_vmem [thread:$0]  %s80, 512, %s82, [#allocation10], 128, 128, 8
    $region41: #{tpu_custom_call.1} parent=1 // pred_fallthru
      _
    // Predicated region
    $region42: #{tpu_custom_call.1} parent=1 // pred_check
      _
    $region43: #{tpu_custom_call.1} parent=1 // pred_check_branch
      %89 = sbr.rel (0) target = $region45
    $region44: #{tpu_custom_call.1} parent=1 // pred_region
      _
    $region45: #{tpu_custom_call.1} parent=1 // pred_fallthru
      _
    // Predicated region
    $region46: #{tpu_custom_call.1} parent=1 // pred_check
      _
    $region47: #{tpu_custom_call.1} parent=1 // pred_check_branch
      %91 = sbr.rel (0) target = $region49
    $region48: #{tpu_custom_call.1} parent=1 // pred_region
      %93 = dma.done [#allocation4], 256
    $region49: #{tpu_custom_call.1} parent=1 // pred_fallthru
      _
    // Predicated region
    $region50: #{tpu_custom_call.1} parent=1 // pred_check
      _
    $region51: #{tpu_custom_call.1} parent=1 // pred_check_branch
      %95 = sbr.rel (0) target = $region53
    $region52: #{tpu_custom_call.1} parent=1 // pred_region
      %97 = dma.done [#allocation7], 256
    $region53: #{tpu_custom_call.1} parent=1 // pred_fallthru
      _
    // Predicated region
    $region54: #{tpu_custom_call.1} parent=1 // pred_check
      _
    $region55: #{tpu_custom_call.1} parent=1 // pred_check_branch
      %99 = sbr.rel (0) target = $region57
    $region56: #{tpu_custom_call.1} parent=1 // pred_region
      %101 = dma.done [#allocation7], 512
    $region57: #{tpu_custom_call.1} parent=1 // pred_fallthru
      _
    // Predicated region
    $region58: #{tpu_custom_call.1} parent=1 // pred_check
      _
    $region59: #{tpu_custom_call.1} parent=1 // pred_check_branch
      %103 = sbr.rel (0) target = $region61
    $region60: #{tpu_custom_call.1} parent=1 // pred_region
      %105 = dma.done [#allocation10], 512
    $region61: #{tpu_custom_call.1} parent=1 // pred_fallthru
      _
    %v106 = vld [vmem:[#allocation6] sm:$0xff]
    %v107 = vld [vmem:[#allocation6 + $0x8] sm:$0xff]
    %v108 = vld [vmem:[%s4] sm:$0xff]
    %v109 = vld [vmem:[%s4 + $0x8] sm:$0xff]
    %v110 = vld [vmem:[%s4 + $0x10] sm:$0xff]
    %v111 = vld [vmem:[%s4 + $0x18] sm:$0xff]
    %v112 = vld [vmem:[%s5] sm:$0x1]
    %v113 = vld [vmem:[%s0] sm:$0xff]
    %v114 = vld [vmem:[%s0 + $0x8] sm:$0xff]
    %v115 = vld [vmem:[%s0 + $0x10] sm:$0xff]
    %v116 = vld [vmem:[%s0 + $0x18] sm:$0xff]
    %v117 = vld [vmem:[%s0 + $0x20] sm:$0xff]
    %v118 = vld [vmem:[%s0 + $0x28] sm:$0xff]
    %v119 = vld [vmem:[%s0 + $0x30] sm:$0xff]
    %v120 = vld [vmem:[%s0 + $0x38] sm:$0xff]
    %v122 = vperm.slane %v112, 0
    %vm124 = vcmask 130048
    %v126 = vsel %vm124, %v113, 0
    %v129 = vsel %vm124, %v114, 0
    %v132 = vsel %vm124, %v115, 0
    %v135 = vsel %vm124, %v116, 0
    %v138 = vsel %vm124, %v117, 0
    %v141 = vsel %vm124, %v118, 0
    %v144 = vsel %vm124, %v119, 0
    %v147 = vsel %vm124, %v120, 0
    %149 = vmatpush.msra.mxu0 0.0
    %150 = vmatpush.msra.mxu0 0.0
    %151 = vmatpush.msra.mxu0 0.0
    %152 = vmatpush.msra.mxu0 0.0
    %153 = vmatpush.msra.mxu0 0.0
    %154 = vmatpush.msra.mxu0 0.0
    %155 = vmatpush.msra.mxu0 0.0
    %156 = vmatpush.msra.mxu0 0.0
    %157 = vmatpush.msra.mxu0 0.0
    %158 = vmatpush.msra.mxu0 0.0
    %159 = vmatpush.msra.mxu0 0.0
    %160 = vmatpush.msra.mxu0 0.0
    %161 = vmatpush.msra.mxu0 0.0
    %162 = vmatpush.msra.mxu0 0.0
    %163 = vmatpush.msra.mxu0 %v107
    %164 = vmatpush.msra.mxu0 %v106
    %165 = vmatmul.f32.gmra.mxu0 %v126
    %v166 = vpop.f32.mrf.mxu0
    %v167 = vadd.f32 %v122, %v166
    %168 = vmatmul.f32.gmra.mxu0 %v129
    %v169 = vpop.f32.mrf.mxu0
    %v170 = vadd.f32 %v122, %v169
    %171 = vmatmul.f32.gmra.mxu0 %v132
    %v172 = vpop.f32.mrf.mxu0
    %v173 = vadd.f32 %v122, %v172
    %174 = vmatmul.f32.gmra.mxu0 %v135
    %v175 = vpop.f32.mrf.mxu0
    %v176 = vadd.f32 %v122, %v175
    %177 = vmatmul.f32.gmra.mxu0 %v138
    %v178 = vpop.f32.mrf.mxu0
    %v179 = vadd.f32 %v122, %v178
    %180 = vmatmul.f32.gmra.mxu0 %v141
    %v181 = vpop.f32.mrf.mxu0
    %v182 = vadd.f32 %v122, %v181
    %183 = vmatmul.f32.gmra.mxu0 %v144
    %v184 = vpop.f32.mrf.mxu0
    %v185 = vadd.f32 %v122, %v184
    %186 = vmatmul.f32.gmra.mxu0 %v147
    %v187 = vpop.f32.mrf.mxu0
    %v188 = vadd.f32 %v122, %v187
    %189 = vdwg.mxu0
    %v190 = vld [vmem:[%s1] sm:$0xff]
    %v191 = vld [vmem:[#allocation3] sm:$0xff]
    %vm192 = vcmask 261120
    %v194 = vsel %vm192, %v190, 0
    %196 = vmatpush.msra.mxu0 0.0
    %197 = vmatpush.msra.mxu0 0.0
    %198 = vmatpush.msra.mxu0 0.0
    %199 = vmatpush.msra.mxu0 0.0
    %200 = vmatpush.msra.mxu0 0.0
    %201 = vmatpush.msra.mxu0 0.0
    %202 = vmatpush.msra.mxu0 0.0
    %203 = vmatpush.msra.mxu0 0.0
    %204 = vmatpush.msra.mxu0 0.0
    %205 = vmatpush.msra.mxu0 0.0
    %206 = vmatpush.msra.mxu0 0.0
    %207 = vmatpush.msra.mxu0 0.0
    %208 = vmatpush.msra.mxu0 %v111
    %209 = vmatpush.msra.mxu0 %v110
    %210 = vmatpush.msra.mxu0 %v109
    %211 = vmatpush.msra.mxu0 %v108
    %212 = vmatmul.f32.gmra.mxu0 %v194
    %v213 = vpop.f32.mrf.mxu0
    %v214 = vadd.f32 0.0, %v213
    %215 = vdwg.mxu0
    %v216 = vadd.f32 %v167, %v214
    %v217 = vxor.u32 %v216, 2147483648
    %v218 = vmul.f32 %v217, 1.442695
    %v219 = vpow.pop %v218
    %v220 = vadd.f32 %v219, 1.0
    %v221 = vrcp.pop %v220
    %v222 = vmul.f32 %v220, %v221
    %v223 = vsub.f32 1.0, %v222
    %v224 = vmul.f32 %v221, %v223
    %v225 = vadd.f32 %v221, %v224
    %vm226 = vweird.f32 %v220
    %vm227 = vweird.f32 %v221
    %vm228 = vmor %vm226, %vm227
    %v229 = vsel %vm228, %v221, %v225
    %v230 = vand.u32 2147483647, %v220
    %vm231 = vcmp.eq.f32.partialorder %v230, 8.507059e+37
    %v232 = vand.u32 %v220, 2147483648
    %v233 = vor.u32 1.1754944e-38, %v232
    %v234 = vsel %vm231, %v233, %v229
    %v235 = vmul.f32 1.0, %v234
    %v236 = vtanh.pop %v216
    %238 = vrot.lane.b32.xlu0 %v191, 32
    %v239 = vpop.permute.xlu0 %238
    %v241 = vmul.f32 %v235, %v239
    %243 = vrot.lane.b32.xlu0 %v236, 64
    %v244 = vpop.permute.xlu0 %243
    %v246 = vmul.f32 %v235, %v244
    %248 = vrot.lane.b32.xlu0 %v246, 32
    %v249 = vpop.permute.xlu0 %248
    %v251 = vadd.f32 %v241, %v249
    %v252 = vtanh.pop %v251
    %254 = vrot.lane.b32.xlu0 %v252, 64
    %v255 = vpop.permute.xlu0 %254
    %v257 = vmul.f32 %v235, %v255
    %259 = vrot.lane.b32.xlu0 %v257, 32
    %v260 = vpop.permute.xlu0 %259
    %262 = vst.msk [vmem:[#allocation2] sm:$0xff] %vm192, %v260
    %v263 = vsel %vm192, %v260, 0
    %265 = vmatpush.msra.mxu0 0.0
    %266 = vmatpush.msra.mxu0 0.0
    %267 = vmatpush.msra.mxu0 0.0
    %268 = vmatpush.msra.mxu0 0.0
    %269 = vmatpush.msra.mxu0 0.0
    %270 = vmatpush.msra.mxu0 0.0
    %271 = vmatpush.msra.mxu0 0.0
    %272 = vmatpush.msra.mxu0 0.0
    %273 = vmatpush.msra.mxu0 0.0
    %274 = vmatpush.msra.mxu0 0.0
    %275 = vmatpush.msra.mxu0 0.0
    %276 = vmatpush.msra.mxu0 0.0
    %277 = vmatpush.msra.mxu0 %v111
    %278 = vmatpush.msra.mxu0 %v110
    %279 = vmatpush.msra.mxu0 %v109
    %280 = vmatpush.msra.mxu0 %v108
    %281 = vmatmul.f32.gmra.mxu0 %v263
    %v282 = vpop.f32.mrf.mxu0
    %v283 = vadd.f32 0.0, %v282
    %284 = vdwg.mxu0
    %v285 = vadd.f32 %v170, %v283
    %v286 = vxor.u32 %v285, 2147483648
    %v287 = vmul.f32 %v286, 1.442695
    %v288 = vpow.pop %v287
    %v289 = vadd.f32 %v288, 1.0
    %v290 = vrcp.pop %v289
    %v291 = vmul.f32 %v289, %v290
    %v292 = vsub.f32 1.0, %v291
    %v293 = vmul.f32 %v290, %v292
    %v294 = vadd.f32 %v290, %v293
    %vm295 = vweird.f32 %v289
    %vm296 = vweird.f32 %v290
    %vm297 = vmor %vm295, %vm296
    %v298 = vsel %vm297, %v290, %v294
    %v299 = vand.u32 2147483647, %v289
    %vm300 = vcmp.eq.f32.partialorder %v299, 8.507059e+37
    %v301 = vand.u32 %v289, 2147483648
    %v302 = vor.u32 1.1754944e-38, %v301
    %v303 = vsel %vm300, %v302, %v298
    %v304 = vmul.f32 1.0, %v303
    %v305 = vtanh.pop %v285
    %v306 = vmul.f32 %v304, %v251
    %308 = vrot.lane.b32.xlu0 %v305, 64
    %v309 = vpop.permute.xlu0 %308
    %v311 = vmul.f32 %v304, %v309
    %313 = vrot.lane.b32.xlu0 %v311, 32
    %v314 = vpop.permute.xlu0 %313
    %v316 = vadd.f32 %v306, %v314
    %v317 = vtanh.pop %v316
    %319 = vrot.lane.b32.xlu0 %v317, 64
    %v320 = vpop.permute.xlu0 %319
    %v322 = vmul.f32 %v304, %v320
    %324 = vrot.lane.b32.xlu0 %v322, 32
    %v325 = vpop.permute.xlu0 %324
    %327 = vst.msk [vmem:[#allocation2 + $0x8] sm:$0xff] %vm192, %v325
    %v328 = vsel %vm192, %v325, 0
    %330 = vmatpush.msra.mxu0 0.0
    %331 = vmatpush.msra.mxu0 0.0
    %332 = vmatpush.msra.mxu0 0.0
    %333 = vmatpush.msra.mxu0 0.0
    %334 = vmatpush.msra.mxu0 0.0
    %335 = vmatpush.msra.mxu0 0.0
    %336 = vmatpush.msra.mxu0 0.0
    %337 = vmatpush.msra.mxu0 0.0
    %338 = vmatpush.msra.mxu0 0.0
    %339 = vmatpush.msra.mxu0 0.0
    %340 = vmatpush.msra.mxu0 0.0
    %341 = vmatpush.msra.mxu0 0.0
    %342 = vmatpush.msra.mxu0 %v111
    %343 = vmatpush.msra.mxu0 %v110
    %344 = vmatpush.msra.mxu0 %v109
    %345 = vmatpush.msra.mxu0 %v108
    %346 = vmatmul.f32.gmra.mxu0 %v328
    %v347 = vpop.f32.mrf.mxu0
    %v348 = vadd.f32 0.0, %v347
    %349 = vdwg.mxu0
    %v350 = vadd.f32 %v173, %v348
    %v351 = vxor.u32 %v350, 2147483648
    %v352 = vmul.f32 %v351, 1.442695
    %v353 = vpow.pop %v352
    %v354 = vadd.f32 %v353, 1.0
    %v355 = vrcp.pop %v354
    %v356 = vmul.f32 %v354, %v355
    %v357 = vsub.f32 1.0, %v356
    %v358 = vmul.f32 %v355, %v357
    %v359 = vadd.f32 %v355, %v358
    %vm360 = vweird.f32 %v354
    %vm361 = vweird.f32 %v355
    %vm362 = vmor %vm360, %vm361
    %v363 = vsel %vm362, %v355, %v359
    %v364 = vand.u32 2147483647, %v354
    %vm365 = vcmp.eq.f32.partialorder %v364, 8.507059e+37
    %v366 = vand.u32 %v354, 2147483648
    %v367 = vor.u32 1.1754944e-38, %v366
    %v368 = vsel %vm365, %v367, %v363
    %v369 = vmul.f32 1.0, %v368
    %v370 = vtanh.pop %v350
    %v371 = vmul.f32 %v369, %v316
    %373 = vrot.lane.b32.xlu0 %v370, 64
    %v374 = vpop.permute.xlu0 %373
    %v376 = vmul.f32 %v369, %v374
    %378 = vrot.lane.b32.xlu0 %v376, 32
    %v379 = vpop.permute.xlu0 %378
    %v381 = vadd.f32 %v371, %v379
    %v382 = vtanh.pop %v381
    %384 = vrot.lane.b32.xlu0 %v382, 64
    %v385 = vpop.permute.xlu0 %384
    %v387 = vmul.f32 %v369, %v385
    %389 = vrot.lane.b32.xlu0 %v387, 32
    %v390 = vpop.permute.xlu0 %389
    %392 = vst.msk [vmem:[#allocation2 + $0x10] sm:$0xff] %vm192, %v390
    %v393 = vsel %vm192, %v390, 0
    %395 = vmatpush.msra.mxu0 0.0
    %396 = vmatpush.msra.mxu0 0.0
    %397 = vmatpush.msra.mxu0 0.0
    %398 = vmatpush.msra.mxu0 0.0
    %399 = vmatpush.msra.mxu0 0.0
    %400 = vmatpush.msra.mxu0 0.0
    %401 = vmatpush.msra.mxu0 0.0
    %402 = vmatpush.msra.mxu0 0.0
    %403 = vmatpush.msra.mxu0 0.0
    %404 = vmatpush.msra.mxu0 0.0
    %405 = vmatpush.msra.mxu0 0.0
    %406 = vmatpush.msra.mxu0 0.0
    %407 = vmatpush.msra.mxu0 %v111
    %408 = vmatpush.msra.mxu0 %v110
    %409 = vmatpush.msra.mxu0 %v109
    %410 = vmatpush.msra.mxu0 %v108
    %411 = vmatmul.f32.gmra.mxu0 %v393
    %v412 = vpop.f32.mrf.mxu0
    %v413 = vadd.f32 0.0, %v412
    %414 = vdwg.mxu0
    %v415 = vadd.f32 %v176, %v413
    %v416 = vxor.u32 %v415, 2147483648
    %v417 = vmul.f32 %v416, 1.442695
    %v418 = vpow.pop %v417
    %v419 = vadd.f32 %v418, 1.0
    %v420 = vrcp.pop %v419
    %v421 = vmul.f32 %v419, %v420
    %v422 = vsub.f32 1.0, %v421
    %v423 = vmul.f32 %v420, %v422
    %v424 = vadd.f32 %v420, %v423
    %vm425 = vweird.f32 %v419
    %vm426 = vweird.f32 %v420
    %vm427 = vmor %vm425, %vm426
    %v428 = vsel %vm427, %v420, %v424
    %v429 = vand.u32 2147483647, %v419
    %vm430 = vcmp.eq.f32.partialorder %v429, 8.507059e+37
    %v431 = vand.u32 %v419, 2147483648
    %v432 = vor.u32 1.1754944e-38, %v431
    %v433 = vsel %vm430, %v432, %v428
    %v434 = vmul.f32 1.0, %v433
    %v435 = vtanh.pop %v415
    %v436 = vmul.f32 %v434, %v381
    %438 = vrot.lane.b32.xlu0 %v435, 64
    %v439 = vpop.permute.xlu0 %438
    %v441 = vmul.f32 %v434, %v439
    %443 = vrot.lane.b32.xlu0 %v441, 32
    %v444 = vpop.permute.xlu0 %443
    %v446 = vadd.f32 %v436, %v444
    %v447 = vtanh.pop %v446
    %449 = vrot.lane.b32.xlu0 %v447, 64
    %v450 = vpop.permute.xlu0 %449
    %v452 = vmul.f32 %v434, %v450
    %454 = vrot.lane.b32.xlu0 %v452, 32
    %v455 = vpop.permute.xlu0 %454
    %457 = vst.msk [vmem:[#allocation2 + $0x18] sm:$0xff] %vm192, %v455
    %v458 = vsel %vm192, %v455, 0
    %460 = vmatpush.msra.mxu0 0.0
    %461 = vmatpush.msra.mxu0 0.0
    %462 = vmatpush.msra.mxu0 0.0
    %463 = vmatpush.msra.mxu0 0.0
    %464 = vmatpush.msra.mxu0 0.0
    %465 = vmatpush.msra.mxu0 0.0
    %466 = vmatpush.msra.mxu0 0.0
    %467 = vmatpush.msra.mxu0 0.0
    %468 = vmatpush.msra.mxu0 0.0
    %469 = vmatpush.msra.mxu0 0.0
    %470 = vmatpush.msra.mxu0 0.0
    %471 = vmatpush.msra.mxu0 0.0
    %472 = vmatpush.msra.mxu0 %v111
    %473 = vmatpush.msra.mxu0 %v110
    %474 = vmatpush.msra.mxu0 %v109
    %475 = vmatpush.msra.mxu0 %v108
    %476 = vmatmul.f32.gmra.mxu0 %v458
    %v477 = vpop.f32.mrf.mxu0
    %v478 = vadd.f32 0.0, %v477
    %479 = vdwg.mxu0
    %v480 = vadd.f32 %v179, %v478
    %v481 = vxor.u32 %v480, 2147483648
    %v482 = vmul.f32 %v481, 1.442695
    %v483 = vpow.pop %v482
    %v484 = vadd.f32 %v483, 1.0
    %v485 = vrcp.pop %v484
    %v486 = vmul.f32 %v484, %v485
    %v487 = vsub.f32 1.0, %v486
    %v488 = vmul.f32 %v485, %v487
    %v489 = vadd.f32 %v485, %v488
    %vm490 = vweird.f32 %v484
    %vm491 = vweird.f32 %v485
    %vm492 = vmor %vm490, %vm491
    %v493 = vsel %vm492, %v485, %v489
    %v494 = vand.u32 2147483647, %v484
    %vm495 = vcmp.eq.f32.partialorder %v494, 8.507059e+37
    %v496 = vand.u32 %v484, 2147483648
    %v497 = vor.u32 1.1754944e-38, %v496
    %v498 = vsel %vm495, %v497, %v493
    %v499 = vmul.f32 1.0, %v498
    %v500 = vtanh.pop %v480
    %v501 = vmul.f32 %v499, %v446
    %503 = vrot.lane.b32.xlu0 %v500, 64
    %v504 = vpop.permute.xlu0 %503
    %v506 = vmul.f32 %v499, %v504
    %508 = vrot.lane.b32.xlu0 %v506, 32
    %v509 = vpop.permute.xlu0 %508
    %v511 = vadd.f32 %v501, %v509
    %v512 = vtanh.pop %v511
    %514 = vrot.lane.b32.xlu0 %v512, 64
    %v515 = vpop.permute.xlu0 %514
    %v517 = vmul.f32 %v499, %v515
    %519 = vrot.lane.b32.xlu0 %v517, 32
    %v520 = vpop.permute.xlu0 %519
    %522 = vst.msk [vmem:[#allocation2 + $0x20] sm:$0xff] %vm192, %v520
    %v523 = vsel %vm192, %v520, 0
    %525 = vmatpush.msra.mxu0 0.0
    %526 = vmatpush.msra.mxu0 0.0
    %527 = vmatpush.msra.mxu0 0.0
    %528 = vmatpush.msra.mxu0 0.0
    %529 = vmatpush.msra.mxu0 0.0
    %530 = vmatpush.msra.mxu0 0.0
    %531 = vmatpush.msra.mxu0 0.0
    %532 = vmatpush.msra.mxu0 0.0
    %533 = vmatpush.msra.mxu0 0.0
    %534 = vmatpush.msra.mxu0 0.0
    %535 = vmatpush.msra.mxu0 0.0
    %536 = vmatpush.msra.mxu0 0.0
    %537 = vmatpush.msra.mxu0 %v111
    %538 = vmatpush.msra.mxu0 %v110
    %539 = vmatpush.msra.mxu0 %v109
    %540 = vmatpush.msra.mxu0 %v108
    %541 = vmatmul.f32.gmra.mxu0 %v523
    %v542 = vpop.f32.mrf.mxu0
    %v543 = vadd.f32 0.0, %v542
    %544 = vdwg.mxu0
    %v545 = vadd.f32 %v182, %v543
    %v546 = vxor.u32 %v545, 2147483648
    %v547 = vmul.f32 %v546, 1.442695
    %v548 = vpow.pop %v547
    %v549 = vadd.f32 %v548, 1.0
    %v550 = vrcp.pop %v549
    %v551 = vmul.f32 %v549, %v550
    %v552 = vsub.f32 1.0, %v551
    %v553 = vmul.f32 %v550, %v552
    %v554 = vadd.f32 %v550, %v553
    %vm555 = vweird.f32 %v549
    %vm556 = vweird.f32 %v550
    %vm557 = vmor %vm555, %vm556
    %v558 = vsel %vm557, %v550, %v554
    %v559 = vand.u32 2147483647, %v549
    %vm560 = vcmp.eq.f32.partialorder %v559, 8.507059e+37
    %v561 = vand.u32 %v549, 2147483648
    %v562 = vor.u32 1.1754944e-38, %v561
    %v563 = vsel %vm560, %v562, %v558
    %v564 = vmul.f32 1.0, %v563
    %v565 = vtanh.pop %v545
    %v566 = vmul.f32 %v564, %v511
    %568 = vrot.lane.b32.xlu0 %v565, 64
    %v569 = vpop.permute.xlu0 %568
    %v571 = vmul.f32 %v564, %v569
    %573 = vrot.lane.b32.xlu0 %v571, 32
    %v574 = vpop.permute.xlu0 %573
    %v576 = vadd.f32 %v566, %v574
    %v577 = vtanh.pop %v576
    %579 = vrot.lane.b32.xlu0 %v577, 64
    %v580 = vpop.permute.xlu0 %579
    %v582 = vmul.f32 %v564, %v580
    %584 = vrot.lane.b32.xlu0 %v582, 32
    %v585 = vpop.permute.xlu0 %584
    %587 = vst.msk [vmem:[#allocation2 + $0x28] sm:$0xff] %vm192, %v585
    %v588 = vsel %vm192, %v585, 0
    %590 = vmatpush.msra.mxu0 0.0
    %591 = vmatpush.msra.mxu0 0.0
    %592 = vmatpush.msra.mxu0 0.0
    %593 = vmatpush.msra.mxu0 0.0
    %594 = vmatpush.msra.mxu0 0.0
    %595 = vmatpush.msra.mxu0 0.0
    %596 = vmatpush.msra.mxu0 0.0
    %597 = vmatpush.msra.mxu0 0.0
    %598 = vmatpush.msra.mxu0 0.0
    %599 = vmatpush.msra.mxu0 0.0
    %600 = vmatpush.msra.mxu0 0.0
    %601 = vmatpush.msra.mxu0 0.0
    %602 = vmatpush.msra.mxu0 %v111
    %603 = vmatpush.msra.mxu0 %v110
    %604 = vmatpush.msra.mxu0 %v109
    %605 = vmatpush.msra.mxu0 %v108
    %606 = vmatmul.f32.gmra.mxu0 %v588
    %v607 = vpop.f32.mrf.mxu0
    %v608 = vadd.f32 0.0, %v607
    %609 = vdwg.mxu0
    %v610 = vadd.f32 %v185, %v608
    %v611 = vxor.u32 %v610, 2147483648
    %v612 = vmul.f32 %v611, 1.442695
    %v613 = vpow.pop %v612
    %v614 = vadd.f32 %v613, 1.0
    %v615 = vrcp.pop %v614
    %v616 = vmul.f32 %v614, %v615
    %v617 = vsub.f32 1.0, %v616
    %v618 = vmul.f32 %v615, %v617
    %v619 = vadd.f32 %v615, %v618
    %vm620 = vweird.f32 %v614
    %vm621 = vweird.f32 %v615
    %vm622 = vmor %vm620, %vm621
    %v623 = vsel %vm622, %v615, %v619
    %v624 = vand.u32 2147483647, %v614
    %vm625 = vcmp.eq.f32.partialorder %v624, 8.507059e+37
    %v626 = vand.u32 %v614, 2147483648
    %v627 = vor.u32 1.1754944e-38, %v626
    %v628 = vsel %vm625, %v627, %v623
    %v629 = vmul.f32 1.0, %v628
    %v630 = vtanh.pop %v610
    %v631 = vmul.f32 %v629, %v576
    %633 = vrot.lane.b32.xlu0 %v630, 64
    %v634 = vpop.permute.xlu0 %633
    %v636 = vmul.f32 %v629, %v634
    %638 = vrot.lane.b32.xlu0 %v636, 32
    %v639 = vpop.permute.xlu0 %638
    %v641 = vadd.f32 %v631, %v639
    %v642 = vtanh.pop %v641
    %644 = vrot.lane.b32.xlu0 %v642, 64
    %v645 = vpop.permute.xlu0 %644
    %v647 = vmul.f32 %v629, %v645
    %649 = vrot.lane.b32.xlu0 %v647, 32
    %v650 = vpop.permute.xlu0 %649
    %652 = vst.msk [vmem:[#allocation2 + $0x30] sm:$0xff] %vm192, %v650
    %v653 = vsel %vm192, %v650, 0
    %655 = vmatpush.msra.mxu0 0.0
    %656 = vmatpush.msra.mxu0 0.0
    %657 = vmatpush.msra.mxu0 0.0
    %658 = vmatpush.msra.mxu0 0.0
    %659 = vmatpush.msra.mxu0 0.0
    %660 = vmatpush.msra.mxu0 0.0
    %661 = vmatpush.msra.mxu0 0.0
    %662 = vmatpush.msra.mxu0 0.0
    %663 = vmatpush.msra.mxu0 0.0
    %664 = vmatpush.msra.mxu0 0.0
    %665 = vmatpush.msra.mxu0 0.0
    %666 = vmatpush.msra.mxu0 0.0
    %667 = vmatpush.msra.mxu0 %v111
    %668 = vmatpush.msra.mxu0 %v110
    %669 = vmatpush.msra.mxu0 %v109
    %670 = vmatpush.msra.mxu0 %v108
    %671 = vmatmul.f32.gmra.mxu0 %v653
    %v672 = vpop.f32.mrf.mxu0
    %v673 = vadd.f32 0.0, %v672
    %674 = vdwg.mxu0
    %v675 = vadd.f32 %v188, %v673
    %v676 = vxor.u32 %v675, 2147483648
    %v677 = vmul.f32 %v676, 1.442695
    %v678 = vpow.pop %v677
    %v679 = vadd.f32 %v678, 1.0
    %v680 = vrcp.pop %v679
    %v681 = vmul.f32 %v679, %v680
    %v682 = vsub.f32 1.0, %v681
    %v683 = vmul.f32 %v680, %v682
    %v684 = vadd.f32 %v680, %v683
    %vm685 = vweird.f32 %v679
    %vm686 = vweird.f32 %v680
    %vm687 = vmor %vm685, %vm686
    %v688 = vsel %vm687, %v680, %v684
    %v689 = vand.u32 2147483647, %v679
    %vm690 = vcmp.eq.f32.partialorder %v689, 8.507059e+37
    %v691 = vand.u32 %v679, 2147483648
    %v692 = vor.u32 1.1754944e-38, %v691
    %v693 = vsel %vm690, %v692, %v688
    %v694 = vmul.f32 1.0, %v693
    %v695 = vtanh.pop %v675
    %v696 = vmul.f32 %v694, %v641
    %698 = vrot.lane.b32.xlu0 %v695, 64
    %v699 = vpop.permute.xlu0 %698
    %v701 = vmul.f32 %v694, %v699
    %703 = vrot.lane.b32.xlu0 %v701, 32
    %v704 = vpop.permute.xlu0 %703
    %v706 = vadd.f32 %v696, %v704
    %v707 = vtanh.pop %v706
    %709 = vrot.lane.b32.xlu0 %v707, 64
    %v710 = vpop.permute.xlu0 %709
    %v712 = vmul.f32 %v694, %v710
    %714 = vrot.lane.b32.xlu0 %v712, 32
    %v715 = vpop.permute.xlu0 %714
    %717 = vst.msk [vmem:[#allocation2 + $0x38] sm:$0xff] %vm192, %v715
    %718 = vst.msk [vmem:[#allocation11] sm:$0xff] %vm192, %v715
    %720 = vrot.lane.b32.xlu0 %v706, 96
    %v721 = vpop.permute.xlu0 %720
    %723 = vst.msk [vmem:[#allocation12] sm:$0xff] %vm192, %v721
    %v724 = vld [vmem:[%s6] sm:$0xff]
    %v725 = vld [vmem:[%s6 + $0x8] sm:$0xff]
    %v726 = vld [vmem:[%s6 + $0x10] sm:$0xff]
    %v727 = vld [vmem:[%s6 + $0x18] sm:$0xff]
    %v728 = vld [vmem:[#allocation8] sm:$0xff]
    %v729 = vld [vmem:[#allocation8 + $0x8] sm:$0xff]
    %v730 = vld [vmem:[#allocation8 + $0x10] sm:$0xff]
    %v731 = vld [vmem:[#allocation8 + $0x18] sm:$0xff]
    %v732 = vld [vmem:[%s8] sm:$0x1]
    %v733 = vld [vmem:[#allocation2] sm:$0xff]
    %v734 = vld [vmem:[#allocation2 + $0x8] sm:$0xff]
    %v735 = vld [vmem:[#allocation2 + $0x10] sm:$0xff]
    %v736 = vld [vmem:[#allocation2 + $0x18] sm:$0xff]
    %v737 = vld [vmem:[#allocation2 + $0x20] sm:$0xff]
    %v738 = vld [vmem:[#allocation2 + $0x28] sm:$0xff]
    %v739 = vld [vmem:[#allocation2 + $0x30] sm:$0xff]
    %v740 = vld [vmem:[#allocation2 + $0x38] sm:$0xff]
    %v742 = vperm.slane %v732, 0
    %v745 = vsel %vm192, %v733, 0
    %v748 = vsel %vm192, %v734, 0
    %v751 = vsel %vm192, %v735, 0
    %v754 = vsel %vm192, %v736, 0
    %v757 = vsel %vm192, %v737, 0
    %v760 = vsel %vm192, %v738, 0
    %v763 = vsel %vm192, %v739, 0
    %v766 = vsel %vm192, %v740, 0
    %768 = vmatpush.msra.mxu0 0.0
    %769 = vmatpush.msra.mxu0 0.0
    %770 = vmatpush.msra.mxu0 0.0
    %771 = vmatpush.msra.mxu0 0.0
    %772 = vmatpush.msra.mxu0 0.0
    %773 = vmatpush.msra.mxu0 0.0
    %774 = vmatpush.msra.mxu0 0.0
    %775 = vmatpush.msra.mxu0 0.0
    %776 = vmatpush.msra.mxu0 0.0
    %777 = vmatpush.msra.mxu0 0.0
    %778 = vmatpush.msra.mxu0 0.0
    %779 = vmatpush.msra.mxu0 0.0
    %780 = vmatpush.msra.mxu0 %v727
    %781 = vmatpush.msra.mxu0 %v726
    %782 = vmatpush.msra.mxu0 %v725
    %783 = vmatpush.msra.mxu0 %v724
    %784 = vmatmul.f32.gmra.mxu0 %v745
    %v785 = vpop.f32.mrf.mxu0
    %v786 = vadd.f32 %v742, %v785
    %787 = vmatmul.f32.gmra.mxu0 %v748
    %v788 = vpop.f32.mrf.mxu0
    %v789 = vadd.f32 %v742, %v788
    %790 = vmatmul.f32.gmra.mxu0 %v751
    %v791 = vpop.f32.mrf.mxu0
    %v792 = vadd.f32 %v742, %v791
    %793 = vmatmul.f32.gmra.mxu0 %v754
    %v794 = vpop.f32.mrf.mxu0
    %v795 = vadd.f32 %v742, %v794
    %796 = vmatmul.f32.gmra.mxu0 %v757
    %v797 = vpop.f32.mrf.mxu0
    %v798 = vadd.f32 %v742, %v797
    %799 = vmatmul.f32.gmra.mxu0 %v760
    %v800 = vpop.f32.mrf.mxu0
    %v801 = vadd.f32 %v742, %v800
    %802 = vmatmul.f32.gmra.mxu0 %v763
    %v803 = vpop.f32.mrf.mxu0
    %v804 = vadd.f32 %v742, %v803
    %805 = vmatmul.f32.gmra.mxu0 %v766
    %v806 = vpop.f32.mrf.mxu0
    %v807 = vadd.f32 %v742, %v806
    %808 = vdwg.mxu0
    %s809 = scalar_lea.vmem %s1, 8
    %v810 = vld [vmem:[%s809] sm:$0xff]
    %s811 = scalar_lea.vmem [#allocation3], 8
    %v812 = vld [vmem:[%s811] sm:$0xff]
    %v814 = vsel %vm192, %v810, 0
    %816 = vmatpush.msra.mxu0 0.0
    %817 = vmatpush.msra.mxu0 0.0
    %818 = vmatpush.msra.mxu0 0.0
    %819 = vmatpush.msra.mxu0 0.0
    %820 = vmatpush.msra.mxu0 0.0
    %821 = vmatpush.msra.mxu0 0.0
    %822 = vmatpush.msra.mxu0 0.0
    %823 = vmatpush.msra.mxu0 0.0
    %824 = vmatpush.msra.mxu0 0.0
    %825 = vmatpush.msra.mxu0 0.0
    %826 = vmatpush.msra.mxu0 0.0
    %827 = vmatpush.msra.mxu0 0.0
    %828 = vmatpush.msra.mxu0 %v731
    %829 = vmatpush.msra.mxu0 %v730
    %830 = vmatpush.msra.mxu0 %v729
    %831 = vmatpush.msra.mxu0 %v728
    %832 = vmatmul.f32.gmra.mxu0 %v814
    %v833 = vpop.f32.mrf.mxu0
    %v834 = vadd.f32 0.0, %v833
    %835 = vdwg.mxu0
    %v836 = vadd.f32 %v786, %v834
    %v837 = vxor.u32 %v836, 2147483648
    %v838 = vmul.f32 %v837, 1.442695
    %v839 = vpow.pop %v838
    %v840 = vadd.f32 %v839, 1.0
    %v841 = vrcp.pop %v840
    %v842 = vmul.f32 %v840, %v841
    %v843 = vsub.f32 1.0, %v842
    %v844 = vmul.f32 %v841, %v843
    %v845 = vadd.f32 %v841, %v844
    %vm846 = vweird.f32 %v840
    %vm847 = vweird.f32 %v841
    %vm848 = vmor %vm846, %vm847
    %v849 = vsel %vm848, %v841, %v845
    %v850 = vand.u32 2147483647, %v840
    %vm851 = vcmp.eq.f32.partialorder %v850, 8.507059e+37
    %v852 = vand.u32 %v840, 2147483648
    %v853 = vor.u32 1.1754944e-38, %v852
    %v854 = vsel %vm851, %v853, %v849
    %v855 = vmul.f32 1.0, %v854
    %v856 = vtanh.pop %v836
    %858 = vrot.lane.b32.xlu0 %v812, 32
    %v859 = vpop.permute.xlu0 %858
    %v861 = vmul.f32 %v855, %v859
    %863 = vrot.lane.b32.xlu0 %v856, 64
    %v864 = vpop.permute.xlu0 %863
    %v866 = vmul.f32 %v855, %v864
    %868 = vrot.lane.b32.xlu0 %v866, 32
    %v869 = vpop.permute.xlu0 %868
    %v871 = vadd.f32 %v861, %v869
    %v872 = vtanh.pop %v871
    %874 = vrot.lane.b32.xlu0 %v872, 64
    %v875 = vpop.permute.xlu0 %874
    %v877 = vmul.f32 %v855, %v875
    %879 = vrot.lane.b32.xlu0 %v877, 32
    %v880 = vpop.permute.xlu0 %879
    %v881 = vsel %vm192, %v880, 0
    %883 = vmatpush.msra.mxu0 0.0
    %884 = vmatpush.msra.mxu0 0.0
    %885 = vmatpush.msra.mxu0 0.0
    %886 = vmatpush.msra.mxu0 0.0
    %887 = vmatpush.msra.mxu0 0.0
    %888 = vmatpush.msra.mxu0 0.0
    %889 = vmatpush.msra.mxu0 0.0
    %890 = vmatpush.msra.mxu0 0.0
    %891 = vmatpush.msra.mxu0 0.0
    %892 = vmatpush.msra.mxu0 0.0
    %893 = vmatpush.msra.mxu0 0.0
    %894 = vmatpush.msra.mxu0 0.0
    %895 = vmatpush.msra.mxu0 %v731
    %896 = vmatpush.msra.mxu0 %v730
    %897 = vmatpush.msra.mxu0 %v729
    %898 = vmatpush.msra.mxu0 %v728
    %899 = vmatmul.f32.gmra.mxu0 %v881
    %v900 = vpop.f32.mrf.mxu0
    %v901 = vadd.f32 0.0, %v900
    %902 = vdwg.mxu0
    %v903 = vadd.f32 %v789, %v901
    %v904 = vxor.u32 %v903, 2147483648
    %v905 = vmul.f32 %v904, 1.442695
    %v906 = vpow.pop %v905
    %v907 = vadd.f32 %v906, 1.0
    %v908 = vrcp.pop %v907
    %v909 = vmul.f32 %v907, %v908
    %v910 = vsub.f32 1.0, %v909
    %v911 = vmul.f32 %v908, %v910
    %v912 = vadd.f32 %v908, %v911
    %vm913 = vweird.f32 %v907
    %vm914 = vweird.f32 %v908
    %vm915 = vmor %vm913, %vm914
    %v916 = vsel %vm915, %v908, %v912
    %v917 = vand.u32 2147483647, %v907
    %vm918 = vcmp.eq.f32.partialorder %v917, 8.507059e+37
    %v919 = vand.u32 %v907, 2147483648
    %v920 = vor.u32 1.1754944e-38, %v919
    %v921 = vsel %vm918, %v920, %v916
    %v922 = vmul.f32 1.0, %v921
    %v923 = vtanh.pop %v903
    %v924 = vmul.f32 %v922, %v871
    %926 = vrot.lane.b32.xlu0 %v923, 64
    %v927 = vpop.permute.xlu0 %926
    %v929 = vmul.f32 %v922, %v927
    %931 = vrot.lane.b32.xlu0 %v929, 32
    %v932 = vpop.permute.xlu0 %931
    %v934 = vadd.f32 %v924, %v932
    %v935 = vtanh.pop %v934
    %937 = vrot.lane.b32.xlu0 %v935, 64
    %v938 = vpop.permute.xlu0 %937
    %v940 = vmul.f32 %v922, %v938
    %942 = vrot.lane.b32.xlu0 %v940, 32
    %v943 = vpop.permute.xlu0 %942
    %v944 = vsel %vm192, %v943, 0
    %946 = vmatpush.msra.mxu0 0.0
    %947 = vmatpush.msra.mxu0 0.0
    %948 = vmatpush.msra.mxu0 0.0
    %949 = vmatpush.msra.mxu0 0.0
    %950 = vmatpush.msra.mxu0 0.0
    %951 = vmatpush.msra.mxu0 0.0
    %952 = vmatpush.msra.mxu0 0.0
    %953 = vmatpush.msra.mxu0 0.0
    %954 = vmatpush.msra.mxu0 0.0
    %955 = vmatpush.msra.mxu0 0.0
    %956 = vmatpush.msra.mxu0 0.0
    %957 = vmatpush.msra.mxu0 0.0
    %958 = vmatpush.msra.mxu0 %v731
    %959 = vmatpush.msra.mxu0 %v730
    %960 = vmatpush.msra.mxu0 %v729
    %961 = vmatpush.msra.mxu0 %v728
    %962 = vmatmul.f32.gmra.mxu0 %v944
    %v963 = vpop.f32.mrf.mxu0
    %v964 = vadd.f32 0.0, %v963
    %965 = vdwg.mxu0
    %v966 = vadd.f32 %v792, %v964
    %v967 = vxor.u32 %v966, 2147483648
    %v968 = vmul.f32 %v967, 1.442695
    %v969 = vpow.pop %v968
    %v970 = vadd.f32 %v969, 1.0
    %v971 = vrcp.pop %v970
    %v972 = vmul.f32 %v970, %v971
    %v973 = vsub.f32 1.0, %v972
    %v974 = vmul.f32 %v971, %v973
    %v975 = vadd.f32 %v971, %v974
    %vm976 = vweird.f32 %v970
    %vm977 = vweird.f32 %v971
    %vm978 = vmor %vm976, %vm977
    %v979 = vsel %vm978, %v971, %v975
    %v980 = vand.u32 2147483647, %v970
    %vm981 = vcmp.eq.f32.partialorder %v980, 8.507059e+37
    %v982 = vand.u32 %v970, 2147483648
    %v983 = vor.u32 1.1754944e-38, %v982
    %v984 = vsel %vm981, %v983, %v979
    %v985 = vmul.f32 1.0, %v984
    %v986 = vtanh.pop %v966
    %v987 = vmul.f32 %v985, %v934
    %989 = vrot.lane.b32.xlu0 %v986, 64
    %v990 = vpop.permute.xlu0 %989
    %v992 = vmul.f32 %v985, %v990
    %994 = vrot.lane.b32.xlu0 %v992, 32
    %v995 = vpop.permute.xlu0 %994
    %v997 = vadd.f32 %v987, %v995
    %v998 = vtanh.pop %v997
    %1000 = vrot.lane.b32.xlu0 %v998, 64
    %v1001 = vpop.permute.xlu0 %1000
    %v1003 = vmul.f32 %v985, %v1001
    %1005 = vrot.lane.b32.xlu0 %v1003, 32
    %v1006 = vpop.permute.xlu0 %1005
    %v1007 = vsel %vm192, %v1006, 0
    %1009 = vmatpush.msra.mxu0 0.0
    %1010 = vmatpush.msra.mxu0 0.0
    %1011 = vmatpush.msra.mxu0 0.0
    %1012 = vmatpush.msra.mxu0 0.0
    %1013 = vmatpush.msra.mxu0 0.0
    %1014 = vmatpush.msra.mxu0 0.0
    %1015 = vmatpush.msra.mxu0 0.0
    %1016 = vmatpush.msra.mxu0 0.0
    %1017 = vmatpush.msra.mxu0 0.0
    %1018 = vmatpush.msra.mxu0 0.0
    %1019 = vmatpush.msra.mxu0 0.0
    %1020 = vmatpush.msra.mxu0 0.0
    %1021 = vmatpush.msra.mxu0 %v731
    %1022 = vmatpush.msra.mxu0 %v730
    %1023 = vmatpush.msra.mxu0 %v729
    %1024 = vmatpush.msra.mxu0 %v728
    %1025 = vmatmul.f32.gmra.mxu0 %v1007
    %v1026 = vpop.f32.mrf.mxu0
    %v1027 = vadd.f32 0.0, %v1026
    %1028 = vdwg.mxu0
    %v1029 = vadd.f32 %v795, %v1027
    %v1030 = vxor.u32 %v1029, 2147483648
    %v1031 = vmul.f32 %v1030, 1.442695
    %v1032 = vpow.pop %v1031
    %v1033 = vadd.f32 %v1032, 1.0
    %v1034 = vrcp.pop %v1033
    %v1035 = vmul.f32 %v1033, %v1034
    %v1036 = vsub.f32 1.0, %v1035
    %v1037 = vmul.f32 %v1034, %v1036
    %v1038 = vadd.f32 %v1034, %v1037
    %vm1039 = vweird.f32 %v1033
    %vm1040 = vweird.f32 %v1034
    %vm1041 = vmor %vm1039, %vm1040
    %v1042 = vsel %vm1041, %v1034, %v1038
    %v1043 = vand.u32 2147483647, %v1033
    %vm1044 = vcmp.eq.f32.partialorder %v1043, 8.507059e+37
    %v1045 = vand.u32 %v1033, 2147483648
    %v1046 = vor.u32 1.1754944e-38, %v1045
    %v1047 = vsel %vm1044, %v1046, %v1042
    %v1048 = vmul.f32 1.0, %v1047
    %v1049 = vtanh.pop %v1029
    %v1050 = vmul.f32 %v1048, %v997
    %1052 = vrot.lane.b32.xlu0 %v1049, 64
    %v1053 = vpop.permute.xlu0 %1052
    %v1055 = vmul.f32 %v1048, %v1053
    %1057 = vrot.lane.b32.xlu0 %v1055, 32
    %v1058 = vpop.permute.xlu0 %1057
    %v1060 = vadd.f32 %v1050, %v1058
    %v1061 = vtanh.pop %v1060
    %1063 = vrot.lane.b32.xlu0 %v1061, 64
    %v1064 = vpop.permute.xlu0 %1063
    %v1066 = vmul.f32 %v1048, %v1064
    %1068 = vrot.lane.b32.xlu0 %v1066, 32
    %v1069 = vpop.permute.xlu0 %1068
    %v1070 = vsel %vm192, %v1069, 0
    %1072 = vmatpush.msra.mxu0 0.0
    %1073 = vmatpush.msra.mxu0 0.0
    %1074 = vmatpush.msra.mxu0 0.0
    %1075 = vmatpush.msra.mxu0 0.0
    %1076 = vmatpush.msra.mxu0 0.0
    %1077 = vmatpush.msra.mxu0 0.0
    %1078 = vmatpush.msra.mxu0 0.0
    %1079 = vmatpush.msra.mxu0 0.0
    %1080 = vmatpush.msra.mxu0 0.0
    %1081 = vmatpush.msra.mxu0 0.0
    %1082 = vmatpush.msra.mxu0 0.0
    %1083 = vmatpush.msra.mxu0 0.0
    %1084 = vmatpush.msra.mxu0 %v731
    %1085 = vmatpush.msra.mxu0 %v730
    %1086 = vmatpush.msra.mxu0 %v729
    %1087 = vmatpush.msra.mxu0 %v728
    %1088 = vmatmul.f32.gmra.mxu0 %v1070
    %v1089 = vpop.f32.mrf.mxu0
    %v1090 = vadd.f32 0.0, %v1089
    %1091 = vdwg.mxu0
    %v1092 = vadd.f32 %v798, %v1090
    %v1093 = vxor.u32 %v1092, 2147483648
    %v1094 = vmul.f32 %v1093, 1.442695
    %v1095 = vpow.pop %v1094
    %v1096 = vadd.f32 %v1095, 1.0
    %v1097 = vrcp.pop %v1096
    %v1098 = vmul.f32 %v1096, %v1097
    %v1099 = vsub.f32 1.0, %v1098
    %v1100 = vmul.f32 %v1097, %v1099
    %v1101 = vadd.f32 %v1097, %v1100
    %vm1102 = vweird.f32 %v1096
    %vm1103 = vweird.f32 %v1097
    %vm1104 = vmor %vm1102, %vm1103
    %v1105 = vsel %vm1104, %v1097, %v1101
    %v1106 = vand.u32 2147483647, %v1096
    %vm1107 = vcmp.eq.f32.partialorder %v1106, 8.507059e+37
    %v1108 = vand.u32 %v1096, 2147483648
    %v1109 = vor.u32 1.1754944e-38, %v1108
    %v1110 = vsel %vm1107, %v1109, %v1105
    %v1111 = vmul.f32 1.0, %v1110
    %v1112 = vtanh.pop %v1092
    %v1113 = vmul.f32 %v1111, %v1060
    %1115 = vrot.lane.b32.xlu0 %v1112, 64
    %v1116 = vpop.permute.xlu0 %1115
    %v1118 = vmul.f32 %v1111, %v1116
    %1120 = vrot.lane.b32.xlu0 %v1118, 32
    %v1121 = vpop.permute.xlu0 %1120
    %v1123 = vadd.f32 %v1113, %v1121
    %v1124 = vtanh.pop %v1123
    %1126 = vrot.lane.b32.xlu0 %v1124, 64
    %v1127 = vpop.permute.xlu0 %1126
    %v1129 = vmul.f32 %v1111, %v1127
    %1131 = vrot.lane.b32.xlu0 %v1129, 32
    %v1132 = vpop.permute.xlu0 %1131
    %v1133 = vsel %vm192, %v1132, 0
    %1135 = vmatpush.msra.mxu0 0.0
    %1136 = vmatpush.msra.mxu0 0.0
    %1137 = vmatpush.msra.mxu0 0.0
    %1138 = vmatpush.msra.mxu0 0.0
    %1139 = vmatpush.msra.mxu0 0.0
    %1140 = vmatpush.msra.mxu0 0.0
    %1141 = vmatpush.msra.mxu0 0.0
    %1142 = vmatpush.msra.mxu0 0.0
    %1143 = vmatpush.msra.mxu0 0.0
    %1144 = vmatpush.msra.mxu0 0.0
    %1145 = vmatpush.msra.mxu0 0.0
    %1146 = vmatpush.msra.mxu0 0.0
    %1147 = vmatpush.msra.mxu0 %v731
    %1148 = vmatpush.msra.mxu0 %v730
    %1149 = vmatpush.msra.mxu0 %v729
    %1150 = vmatpush.msra.mxu0 %v728
    %1151 = vmatmul.f32.gmra.mxu0 %v1133
    %v1152 = vpop.f32.mrf.mxu0
    %v1153 = vadd.f32 0.0, %v1152
    %1154 = vdwg.mxu0
    %v1155 = vadd.f32 %v801, %v1153
    %v1156 = vxor.u32 %v1155, 2147483648
    %v1157 = vmul.f32 %v1156, 1.442695
    %v1158 = vpow.pop %v1157
    %v1159 = vadd.f32 %v1158, 1.0
    %v1160 = vrcp.pop %v1159
    %v1161 = vmul.f32 %v1159, %v1160
    %v1162 = vsub.f32 1.0, %v1161
    %v1163 = vmul.f32 %v1160, %v1162
    %v1164 = vadd.f32 %v1160, %v1163
    %vm1165 = vweird.f32 %v1159
    %vm1166 = vweird.f32 %v1160
    %vm1167 = vmor %vm1165, %vm1166
    %v1168 = vsel %vm1167, %v1160, %v1164
    %v1169 = vand.u32 2147483647, %v1159
    %vm1170 = vcmp.eq.f32.partialorder %v1169, 8.507059e+37
    %v1171 = vand.u32 %v1159, 2147483648
    %v1172 = vor.u32 1.1754944e-38, %v1171
    %v1173 = vsel %vm1170, %v1172, %v1168
    %v1174 = vmul.f32 1.0, %v1173
    %v1175 = vtanh.pop %v1155
    %v1176 = vmul.f32 %v1174, %v1123
    %1178 = vrot.lane.b32.xlu0 %v1175, 64
    %v1179 = vpop.permute.xlu0 %1178
    %v1181 = vmul.f32 %v1174, %v1179
    %1183 = vrot.lane.b32.xlu0 %v1181, 32
    %v1184 = vpop.permute.xlu0 %1183
    %v1186 = vadd.f32 %v1176, %v1184
    %v1187 = vtanh.pop %v1186
    %1189 = vrot.lane.b32.xlu0 %v1187, 64
    %v1190 = vpop.permute.xlu0 %1189
    %v1192 = vmul.f32 %v1174, %v1190
    %1194 = vrot.lane.b32.xlu0 %v1192, 32
    %v1195 = vpop.permute.xlu0 %1194
    %v1196 = vsel %vm192, %v1195, 0
    %1198 = vmatpush.msra.mxu0 0.0
    %1199 = vmatpush.msra.mxu0 0.0
    %1200 = vmatpush.msra.mxu0 0.0
    %1201 = vmatpush.msra.mxu0 0.0
    %1202 = vmatpush.msra.mxu0 0.0
    %1203 = vmatpush.msra.mxu0 0.0
    %1204 = vmatpush.msra.mxu0 0.0
    %1205 = vmatpush.msra.mxu0 0.0
    %1206 = vmatpush.msra.mxu0 0.0
    %1207 = vmatpush.msra.mxu0 0.0
    %1208 = vmatpush.msra.mxu0 0.0
    %1209 = vmatpush.msra.mxu0 0.0
    %1210 = vmatpush.msra.mxu0 %v731
    %1211 = vmatpush.msra.mxu0 %v730
    %1212 = vmatpush.msra.mxu0 %v729
    %1213 = vmatpush.msra.mxu0 %v728
    %1214 = vmatmul.f32.gmra.mxu0 %v1196
    %v1215 = vpop.f32.mrf.mxu0
    %v1216 = vadd.f32 0.0, %v1215
    %1217 = vdwg.mxu0
    %v1218 = vadd.f32 %v804, %v1216
    %v1219 = vxor.u32 %v1218, 2147483648
    %v1220 = vmul.f32 %v1219, 1.442695
    %v1221 = vpow.pop %v1220
    %v1222 = vadd.f32 %v1221, 1.0
    %v1223 = vrcp.pop %v1222
    %v1224 = vmul.f32 %v1222, %v1223
    %v1225 = vsub.f32 1.0, %v1224
    %v1226 = vmul.f32 %v1223, %v1225
    %v1227 = vadd.f32 %v1223, %v1226
    %vm1228 = vweird.f32 %v1222
    %vm1229 = vweird.f32 %v1223
    %vm1230 = vmor %vm1228, %vm1229
    %v1231 = vsel %vm1230, %v1223, %v1227
    %v1232 = vand.u32 2147483647, %v1222
    %vm1233 = vcmp.eq.f32.partialorder %v1232, 8.507059e+37
    %v1234 = vand.u32 %v1222, 2147483648
    %v1235 = vor.u32 1.1754944e-38, %v1234
    %v1236 = vsel %vm1233, %v1235, %v1231
    %v1237 = vmul.f32 1.0, %v1236
    %v1238 = vtanh.pop %v1218
    %v1239 = vmul.f32 %v1237, %v1186
    %1241 = vrot.lane.b32.xlu0 %v1238, 64
    %v1242 = vpop.permute.xlu0 %1241
    %v1244 = vmul.f32 %v1237, %v1242
    %1246 = vrot.lane.b32.xlu0 %v1244, 32
    %v1247 = vpop.permute.xlu0 %1246
    %v1249 = vadd.f32 %v1239, %v1247
    %v1250 = vtanh.pop %v1249
    %1252 = vrot.lane.b32.xlu0 %v1250, 64
    %v1253 = vpop.permute.xlu0 %1252
    %v1255 = vmul.f32 %v1237, %v1253
    %1257 = vrot.lane.b32.xlu0 %v1255, 32
    %v1258 = vpop.permute.xlu0 %1257
    %v1259 = vsel %vm192, %v1258, 0
    %1261 = vmatpush.msra.mxu0 0.0
    %1262 = vmatpush.msra.mxu0 0.0
    %1263 = vmatpush.msra.mxu0 0.0
    %1264 = vmatpush.msra.mxu0 0.0
    %1265 = vmatpush.msra.mxu0 0.0
    %1266 = vmatpush.msra.mxu0 0.0
    %1267 = vmatpush.msra.mxu0 0.0
    %1268 = vmatpush.msra.mxu0 0.0
    %1269 = vmatpush.msra.mxu0 0.0
    %1270 = vmatpush.msra.mxu0 0.0
    %1271 = vmatpush.msra.mxu0 0.0
    %1272 = vmatpush.msra.mxu0 0.0
    %1273 = vmatpush.msra.mxu0 %v731
    %1274 = vmatpush.msra.mxu0 %v730
    %1275 = vmatpush.msra.mxu0 %v729
    %1276 = vmatpush.msra.mxu0 %v728
    %1277 = vmatmul.f32.gmra.mxu0 %v1259
    %v1278 = vpop.f32.mrf.mxu0
    %v1279 = vadd.f32 0.0, %v1278
    %1280 = vdwg.mxu0
    %v1281 = vadd.f32 %v807, %v1279
    %v1282 = vxor.u32 %v1281, 2147483648
    %v1283 = vmul.f32 %v1282, 1.442695
    %v1284 = vpow.pop %v1283
    %v1285 = vadd.f32 %v1284, 1.0
    %v1286 = vrcp.pop %v1285
    %v1287 = vmul.f32 %v1285, %v1286
    %v1288 = vsub.f32 1.0, %v1287
    %v1289 = vmul.f32 %v1286, %v1288
    %v1290 = vadd.f32 %v1286, %v1289
    %vm1291 = vweird.f32 %v1285
    %vm1292 = vweird.f32 %v1286
    %vm1293 = vmor %vm1291, %vm1292
    %v1294 = vsel %vm1293, %v1286, %v1290
    %v1295 = vand.u32 2147483647, %v1285
    %vm1296 = vcmp.eq.f32.partialorder %v1295, 8.507059e+37
    %v1297 = vand.u32 %v1285, 2147483648
    %v1298 = vor.u32 1.1754944e-38, %v1297
    %v1299 = vsel %vm1296, %v1298, %v1294
    %v1300 = vmul.f32 1.0, %v1299
    %v1301 = vtanh.pop %v1281
    %v1302 = vmul.f32 %v1300, %v1249
    %1304 = vrot.lane.b32.xlu0 %v1301, 64
    %v1305 = vpop.permute.xlu0 %1304
    %v1307 = vmul.f32 %v1300, %v1305
    %1309 = vrot.lane.b32.xlu0 %v1307, 32
    %v1310 = vpop.permute.xlu0 %1309
    %v1312 = vadd.f32 %v1302, %v1310
    %v1313 = vtanh.pop %v1312
    %1315 = vrot.lane.b32.xlu0 %v1313, 64
    %v1316 = vpop.permute.xlu0 %1315
    %v1318 = vmul.f32 %v1300, %v1316
    %1320 = vrot.lane.b32.xlu0 %v1318, 32
    %v1321 = vpop.permute.xlu0 %1320
    %s1323 = scalar_lea.vmem [#allocation11], 8
    %1324 = vst.msk [vmem:[%s1323] sm:$0xff] %vm192, %v1321
    %1326 = vrot.lane.b32.xlu0 %v1312, 96
    %v1327 = vpop.permute.xlu0 %1326
    %s1329 = scalar_lea.vmem [#allocation12], 8
    %1330 = vst.msk [vmem:[%s1329] sm:$0xff] %vm192, %v1327
    %v1331 = vld [vmem:[#allocation9] sm:$0xff]
    %v1332 = vld [vmem:[#allocation9 + $0x8] sm:$0xff]
    %v1333 = vld [vmem:[#allocation9 + $0x10] sm:$0xff]
    %v1334 = vld [vmem:[#allocation9 + $0x18] sm:$0xff]
    %v1335 = vld [vmem:[%s10] sm:$0x1]
    %v1337 = vperm.slane %v1335, 0
    %v1339 = vsel %vm192, %v1321, 0
    %1341 = vmatpush.msra.mxu0 0.0
    %1342 = vmatpush.msra.mxu0 0.0
    %1343 = vmatpush.msra.mxu0 0.0
    %1344 = vmatpush.msra.mxu0 0.0
    %1345 = vmatpush.msra.mxu0 0.0
    %1346 = vmatpush.msra.mxu0 0.0
    %1347 = vmatpush.msra.mxu0 0.0
    %1348 = vmatpush.msra.mxu0 0.0
    %1349 = vmatpush.msra.mxu0 0.0
    %1350 = vmatpush.msra.mxu0 0.0
    %1351 = vmatpush.msra.mxu0 0.0
    %1352 = vmatpush.msra.mxu0 0.0
    %1353 = vmatpush.msra.mxu0 %v1334
    %1354 = vmatpush.msra.mxu0 %v1333
    %1355 = vmatpush.msra.mxu0 %v1332
    %1356 = vmatpush.msra.mxu0 %v1331
    %1357 = vmatmul.f32.gmra.mxu0 %v1339
    %v1358 = vpop.f32.mrf.mxu0
    %v1359 = vadd.f32 %v1337, %v1358
    %1360 = vdwg.mxu0
    %1361 = vst [vmem:[#allocation14] sm:$0xff] %v1359
    // Predicated region
    $region62: #{tpu_custom_call.1} parent=1 // pred_check
      _
    $region63: #{tpu_custom_call.1} parent=1 // pred_check_branch
      %1363 = sbr.rel (0) target = $region65
    $region64: #{tpu_custom_call.1} parent=1 // pred_region
      %1365 = vsyncadd [#allocation5], 0
      %s1366 = sshll.u32 [#allocation11], 4
      %s1367 = int_to_ptr.vmem [resolvable:$true] %s1366
      %s1368 = sshll.u32 %s11, 4
      %s1369 = int_to_ptr.hbm [resolvable:$true] %s1368
      %1374 = dma.vmem_to_hbm [thread:$0]  %s1367, 256, %s1369, [#allocation5], 128, 128, 8
    $region65: #{tpu_custom_call.1} parent=1 // pred_fallthru
      _
    // Predicated region
    $region66: #{tpu_custom_call.1} parent=1 // pred_check
      _
    $region67: #{tpu_custom_call.1} parent=1 // pred_check_branch
      %1376 = sbr.rel (0) target = $region69
    $region68: #{tpu_custom_call.1} parent=1 // pred_region
      %1378 = vsyncadd [#allocation13], 0
      %s1379 = sshll.u32 [#allocation12], 4
      %s1380 = int_to_ptr.vmem [resolvable:$true] %s1379
      %s1381 = sshll.u32 %s12, 4
      %s1382 = int_to_ptr.hbm [resolvable:$true] %s1381
      %1387 = dma.vmem_to_hbm [thread:$0]  %s1380, 256, %s1382, [#allocation13], 128, 128, 8
    $region69: #{tpu_custom_call.1} parent=1 // pred_fallthru
      _
    // Predicated region
    $region70: #{tpu_custom_call.1} parent=1 // pred_check
      _
    $region71: #{tpu_custom_call.1} parent=1 // pred_check_branch
      %1389 = sbr.rel (0) target = $region73
    $region72: #{tpu_custom_call.1} parent=1 // pred_region
      %1391 = vsyncadd [#allocation13], 0
      %s1393 = sshll.u32 [#allocation14], 4
      %s1394 = int_to_ptr.vmem [resolvable:$true] %s1393
      %s1395 = sshll.u32 %s13, 4
      %s1396 = int_to_ptr.hbm [resolvable:$true] %s1395
      %1398 = dma.vmem_to_hbm [thread:$0]  %s1394, 128, %s1396, [#allocation13]
    $region73: #{tpu_custom_call.1} parent=1 // pred_fallthru
      _
    // Predicated region
    $region74: #{tpu_custom_call.1} parent=1 // pred_check
      _
    $region75: #{tpu_custom_call.1} parent=1 // pred_check_branch
      %1400 = sbr.rel (0) target = $region77
    $region76: #{tpu_custom_call.1} parent=1 // pred_region
      %1402 = dma.done [#allocation5], 256
    $region77: #{tpu_custom_call.1} parent=1 // pred_fallthru
      _
    // Predicated region
    $region78: #{tpu_custom_call.1} parent=1 // pred_check
      _
    $region79: #{tpu_custom_call.1} parent=1 // pred_check_branch
      %1404 = sbr.rel (0) target = $region81
    $region80: #{tpu_custom_call.1} parent=1 // pred_region
      %1406 = dma.done [#allocation13], 256
    $region81: #{tpu_custom_call.1} parent=1 // pred_fallthru
      _
    // Predicated region
    $region82: #{tpu_custom_call.1} parent=1 // pred_check
      _
    $region83: #{tpu_custom_call.1} parent=1 // pred_check_branch
      %1408 = sbr.rel (0) target = $region85
    $region84: #{tpu_custom_call.1} parent=1 // pred_region
      %1410 = dma.done [#allocation13], 128
    $region85: #{tpu_custom_call.1} parent=1 // pred_fallthru
      _
    %1411 = vsyncpa [#allocation4], 1
    %1412 = vsyncpa [#allocation7], 1
    %1413 = vsyncpa [#allocation10], 1
    %1414 = vsyncpa [#allocation5], 1
    %1415 = vsyncpa [#allocation13], 1

</llo_original>
